<compile_context>
chip_gen: v7x
topology: tpu7x:2x2x1
jax: 0.10.0
libtpu: 0.0.40
codegen_flags: <defaults>
</compile_context>

<pallas_src>
import jax
import jax.numpy as jnp
from jax.experimental import pallas as pl
from jax.experimental.pallas import tpu as pltpu

N_LAYERS = 10
SKIP_TANH_LAYER = 4        # encoder's final projection to z has no activation
LANE = 128                 # TPU vreg lane width
SUBLANE = 8                # TPU vreg sublane count (f32)


def _round_up(n, m):
    return ((n + m - 1) // m) * m


# ---------------------------------------------------------------------------
# Kernel: one batch tile of the fused 10-layer MLP.
#   refs = (x_ref, w0, b0, ..., w9, b9, out_ref)
# Weights may be bf16 (matmul inputs cast to the weight dtype, f32 accumulate)
# or f32; biases and the tanh chain are always f32.
# ---------------------------------------------------------------------------
def _generator_fc_kernel(x_ref, *refs):
    out_ref = refs[-1]
    param_refs = refs[:-1]
    n_layers = len(param_refs) // 2

    h = x_ref[...].astype(jnp.float32)
    for li in range(n_layers):
        w = param_refs[2 * li][...]                      # (K_pad, N_pad)
        b = param_refs[2 * li + 1][...].astype(jnp.float32)  # (1, N_pad)
        # MXU matmul: inputs in the weight dtype (bf16 fast path), f32 accum.
        h = jnp.dot(h.astype(w.dtype), w,
                    preferred_element_type=jnp.float32) + b
        if li != SKIP_TANH_LAYER:
            h = jnp.tanh(h)                              # f32 on EUP
    out_ref[...] = h.astype(out_ref.dtype)


# ---------------------------------------------------------------------------
# Wrapper: pads feature dims to multiples of 128, pads/tiles the batch,
# builds the gridded pallas_call.
# ---------------------------------------------------------------------------
def generator_fc_forward(x, params, *, use_bf16=True, m_tile=None):
    """x: (B, C, L) float32.  params: flat list [w0, b0, ..., w9, b9] with
    w_i of shape (in_features, out_features) and b_i of shape (out_features,)
    (y = x @ W + b, i.e. W = W_pt.T)."""
    B, C, L = x.shape
    x_dim = C * L
    x_flat = x.reshape(B, x_dim)

    # Layer widths: [x_dim, 8h, 4h, 2h, h, z, h, 2h, 4h, 8h, x_dim]
    dims = [params[2 * li].shape[0] for li in range(N_LAYERS)]
    dims.append(params[2 * (N_LAYERS - 1)].shape[1])
    pdims = [_round_up(d, LANE) for d in dims]           # lane-dense widths
    x_dim_pad = pdims[0]
    out_dim_pad = pdims[-1]

    # Batch tile: large (256) once the batch is realistic, else just round the
    # batch up to a sublane multiple.  Tile sizes here are far below the v7x
    # 64 MiB VMEM budget (weights ~10*128*128*2B, activations m_tile*128*4B*2).
    if m_tile is None:
        m_tile = 256 if B >= 256 else _round_up(max(B, 1), SUBLANE)
    B_pad = _round_up(B, m_tile)

    w_dtype = jnp.bfloat16 if use_bf16 else jnp.float32

    # Zero-pad parameters into lane-dense shapes.  Padded weight rows/cols and
    # bias entries are zero, so padded activation columns stay exactly zero
    # through every layer and the valid region is unchanged.
    padded_params = []
    in_specs = [pl.BlockSpec((m_tile, x_dim_pad), lambda i: (i, 0))]
    for li in range(N_LAYERS):
        w = params[2 * li]
        b = params[2 * li + 1]
        fi, fo = w.shape
        fip, fop = pdims[li], pdims[li + 1]
        wp = jnp.zeros((fip, fop), w_dtype).at[:fi, :fo].set(w.astype(w_dtype))
        bp = jnp.zeros((1, fop), jnp.float32).at[:, :fo].set(
            b.reshape(1, fo).astype(jnp.float32))
        padded_params.extend([wp, bp])
        # Weights/biases: full-array VMEM blocks, constant index_map -> they
        # stay resident across the whole batch grid.
        in_specs.append(pl.BlockSpec((fip, fop), lambda i: (0, 0)))
        in_specs.append(pl.BlockSpec((1, fop), lambda i: (0, 0)))

    # Pad the input activations (extra rows/cols are zero and discarded).
    x_pad = jnp.zeros((B_pad, x_dim_pad), jnp.float32).at[:B, :x_dim].set(x_flat)

    out_pad = pl.pallas_call(
        _generator_fc_kernel,
        out_shape=jax.ShapeDtypeStruct((B_pad, out_dim_pad), jnp.float32),
        grid=(B_pad // m_tile,),
        in_specs=in_specs,
        out_specs=pl.BlockSpec((m_tile, out_dim_pad), lambda i: (i, 0)),
        compiler_params=pltpu.CompilerParams(
            dimension_semantics=("parallel",),
            vmem_limit_bytes=32 * 1024 * 1024),
    )(x_pad, *padded_params)

    return out_pad[:B, :x_dim].reshape(B, C, L)


# ---------------------------------------------------------------------------
# Deterministic parameter construction (PyTorch nn.Linear-style uniform init,
# seeded with jax.random — synthetic weights, not a checkpoint).
# ---------------------------------------------------------------------------
def make_params(key, x_dim, h_dim, z_dim):
    enc_dims = [x_dim, h_dim * 8, h_dim * 4, h_dim * 2, h_dim, z_dim]
    dec_dims = [z_dim, h_dim, h_dim * 2, h_dim * 4, h_dim * 8, x_dim]
    layer_dims = list(zip(enc_dims[:-1], enc_dims[1:])) + \
                 list(zip(dec_dims[:-1], dec_dims[1:]))

    params = []
    for (fan_in, fan_out) in layer_dims:
        key, kw, kb = jax.random.split(key, 3)
        bound = 1.0 / jnp.sqrt(jnp.float32(fan_in))
        w = jax.random.uniform(kw, (fan_in, fan_out), jnp.float32,
                               minval=-bound, maxval=bound)
        b = jax.random.uniform(kb, (fan_out,), jnp.float32,
                               minval=-bound, maxval=bound)
        params.extend([w, b])
    return params


# Pure-JAX reference (f32) for correctness checks.
def reference_forward(x, params):
    B, C, L = x.shape
    h = x.reshape(B, C * L)
    for li in range(N_LAYERS):
        h = h @ params[2 * li] + params[2 * li + 1]
        if li != SKIP_TANH_LAYER:
            h = jnp.tanh(h)
    return h.reshape(B, C, L)


if __name__ == "__main__":
    # Small shapes consistent with the module: batch=2, channels=4, seq=8.
    B, C, L = 2, 4, 8
    x_dim = C * L        # 32
    h_dim = 16
    z_dim = 8

    key = jax.random.PRNGKey(0)
    key, kx = jax.random.split(key)
    x = jax.random.normal(kx, (B, C, L), dtype=jnp.float32)
    params = make_params(key, x_dim, h_dim, z_dim)

    ref = reference_forward(x, params)

    # f32-weight path: should match the reference tightly.
    out_f32 = jax.block_until_ready(
        generator_fc_forward(x, params, use_bf16=False))
    assert out_f32.shape == (B, C, L)
    assert jnp.allclose(out_f32, ref, atol=1e-4, rtol=1e-4), \
        "f32 path mismatch vs reference"

    # bf16-weight fast path: accumulate in f32, looser tolerance (tanh-bounded
    # outputs in [-1, 1]).
    out_bf16 = jax.block_until_ready(
        generator_fc_forward(x, params, use_bf16=True))
    assert out_bf16.shape == (B, C, L)
    assert jnp.allclose(out_bf16, ref, atol=5e-2, rtol=5e-2), \
        "bf16 path mismatch vs reference"

    print("KERNEL_OK")
</pallas_src>

<mosaic_0001>
module attributes {stable_mosaic.version = 11 : i64} {
  func.func @_generator_fc_kernel(%arg0: i32, %arg1: memref<8x128xf32, #tpu.memory_space<vmem>>, %arg2: memref<128x128xf32, #tpu.memory_space<vmem>>, %arg3: memref<1x128xf32, #tpu.memory_space<vmem>>, %arg4: memref<128x128xf32, #tpu.memory_space<vmem>>, %arg5: memref<1x128xf32, #tpu.memory_space<vmem>>, %arg6: memref<128x128xf32, #tpu.memory_space<vmem>>, %arg7: memref<1x128xf32, #tpu.memory_space<vmem>>, %arg8: memref<128x128xf32, #tpu.memory_space<vmem>>, %arg9: memref<1x128xf32, #tpu.memory_space<vmem>>, %arg10: memref<128x128xf32, #tpu.memory_space<vmem>>, %arg11: memref<1x128xf32, #tpu.memory_space<vmem>>, %arg12: memref<128x128xf32, #tpu.memory_space<vmem>>, %arg13: memref<1x128xf32, #tpu.memory_space<vmem>>, %arg14: memref<128x128xf32, #tpu.memory_space<vmem>>, %arg15: memref<1x128xf32, #tpu.memory_space<vmem>>, %arg16: memref<128x128xf32, #tpu.memory_space<vmem>>, %arg17: memref<1x128xf32, #tpu.memory_space<vmem>>, %arg18: memref<128x128xf32, #tpu.memory_space<vmem>>, %arg19: memref<1x128xf32, #tpu.memory_space<vmem>>, %arg20: memref<128x128xf32, #tpu.memory_space<vmem>>, %arg21: memref<1x128xf32, #tpu.memory_space<vmem>>, %arg22: memref<8x128xf32, #tpu.memory_space<vmem>>) attributes {dimension_semantics = [#tpu.dimension_semantics<parallel>], iteration_bounds = array<i64: 1>, scalar_prefetch = 0 : i64, scratch_operands = 0 : i64, tpu.core_type = #tpu.core_type<tc>, window_params = [{transform_indices = @transform_0, window_bounds = array<i64: 8, 128>}, {pipeline_mode = #tpu.pipeline_mode<synchronous>, transform_indices = @transform_1, window_bounds = array<i64: 128, 128>}, {pipeline_mode = #tpu.pipeline_mode<synchronous>, transform_indices = @transform_2, window_bounds = array<i64: 1, 128>}, {pipeline_mode = #tpu.pipeline_mode<synchronous>, transform_indices = @transform_3, window_bounds = array<i64: 128, 128>}, {pipeline_mode = #tpu.pipeline_mode<synchronous>, transform_indices = @transform_4, window_bounds = array<i64: 1, 128>}, {pipeline_mode = #tpu.pipeline_mode<synchronous>, transform_indices = @transform_5, window_bounds = array<i64: 128, 128>}, {pipeline_mode = #tpu.pipeline_mode<synchronous>, transform_indices = @transform_6, window_bounds = array<i64: 1, 128>}, {pipeline_mode = #tpu.pipeline_mode<synchronous>, transform_indices = @transform_7, window_bounds = array<i64: 128, 128>}, {pipeline_mode = #tpu.pipeline_mode<synchronous>, transform_indices = @transform_8, window_bounds = array<i64: 1, 128>}, {pipeline_mode = #tpu.pipeline_mode<synchronous>, transform_indices = @transform_9, window_bounds = array<i64: 128, 128>}, {pipeline_mode = #tpu.pipeline_mode<synchronous>, transform_indices = @transform_10, window_bounds = array<i64: 1, 128>}, {pipeline_mode = #tpu.pipeline_mode<synchronous>, transform_indices = @transform_11, window_bounds = array<i64: 128, 128>}, {pipeline_mode = #tpu.pipeline_mode<synchronous>, transform_indices = @transform_12, window_bounds = array<i64: 1, 128>}, {pipeline_mode = #tpu.pipeline_mode<synchronous>, transform_indices = @transform_13, window_bounds = array<i64: 128, 128>}, {pipeline_mode = #tpu.pipeline_mode<synchronous>, transform_indices = @transform_14, window_bounds = array<i64: 1, 128>}, {pipeline_mode = #tpu.pipeline_mode<synchronous>, transform_indices = @transform_15, window_bounds = array<i64: 128, 128>}, {pipeline_mode = #tpu.pipeline_mode<synchronous>, transform_indices = @transform_16, window_bounds = array<i64: 1, 128>}, {pipeline_mode = #tpu.pipeline_mode<synchronous>, transform_indices = @transform_17, window_bounds = array<i64: 128, 128>}, {pipeline_mode = #tpu.pipeline_mode<synchronous>, transform_indices = @transform_18, window_bounds = array<i64: 1, 128>}, {pipeline_mode = #tpu.pipeline_mode<synchronous>, transform_indices = @transform_19, window_bounds = array<i64: 128, 128>}, {pipeline_mode = #tpu.pipeline_mode<synchronous>, transform_indices = @transform_20, window_bounds = array<i64: 1, 128>}, {transform_indices = @transform_21, window_bounds = array<i64: 8, 128>}]} {
    %c0 = arith.constant 0 : index
    %c0_0 = arith.constant 0 : index
    %0 = vector.load %arg1[%c0, %c0_0] : memref<8x128xf32, #tpu.memory_space<vmem>>, vector<8x128xf32>
    %c0_1 = arith.constant 0 : index
    %c0_2 = arith.constant 0 : index
    %1 = vector.load %arg2[%c0_1, %c0_2] : memref<128x128xf32, #tpu.memory_space<vmem>>, vector<128x128xf32>
    %c0_3 = arith.constant 0 : index
    %c0_4 = arith.constant 0 : index
    %2 = vector.load %arg3[%c0_3, %c0_4] : memref<1x128xf32, #tpu.memory_space<vmem>>, vector<1x128xf32>
    %cst = arith.constant dense<0.000000e+00> : vector<8x128xf32>
    %3 = tpu.matmul %0, %1, %cst {dimension_numbers = #tpu.dot_dimension_numbers<[1], [0], [0], [1], [0, 0, 1, 1], [], []>} : vector<8x128xf32>, vector<128x128xf32>, vector<8x128xf32> -> vector<8x128xf32>
    %4 = vector.broadcast %2 : vector<1x128xf32> to vector<8x128xf32>
    %5 = arith.addf %3, %4 : vector<8x128xf32>
    %6 = math.tanh %5 : vector<8x128xf32>
    %c0_5 = arith.constant 0 : index
    %c0_6 = arith.constant 0 : index
    %7 = vector.load %arg4[%c0_5, %c0_6] : memref<128x128xf32, #tpu.memory_space<vmem>>, vector<128x128xf32>
    %c0_7 = arith.constant 0 : index
    %c0_8 = arith.constant 0 : index
    %8 = vector.load %arg5[%c0_7, %c0_8] : memref<1x128xf32, #tpu.memory_space<vmem>>, vector<1x128xf32>
    %cst_9 = arith.constant dense<0.000000e+00> : vector<8x128xf32>
    %9 = tpu.matmul %6, %7, %cst_9 {dimension_numbers = #tpu.dot_dimension_numbers<[1], [0], [0], [1], [0, 0, 1, 1], [], []>} : vector<8x128xf32>, vector<128x128xf32>, vector<8x128xf32> -> vector<8x128xf32>
    %10 = vector.broadcast %8 : vector<1x128xf32> to vector<8x128xf32>
    %11 = arith.addf %9, %10 : vector<8x128xf32>
    %12 = math.tanh %11 : vector<8x128xf32>
    %c0_10 = arith.constant 0 : index
    %c0_11 = arith.constant 0 : index
    %13 = vector.load %arg6[%c0_10, %c0_11] : memref<128x128xf32, #tpu.memory_space<vmem>>, vector<128x128xf32>
    %c0_12 = arith.constant 0 : index
    %c0_13 = arith.constant 0 : index
    %14 = vector.load %arg7[%c0_12, %c0_13] : memref<1x128xf32, #tpu.memory_space<vmem>>, vector<1x128xf32>
    %cst_14 = arith.constant dense<0.000000e+00> : vector<8x128xf32>
    %15 = tpu.matmul %12, %13, %cst_14 {dimension_numbers = #tpu.dot_dimension_numbers<[1], [0], [0], [1], [0, 0, 1, 1], [], []>} : vector<8x128xf32>, vector<128x128xf32>, vector<8x128xf32> -> vector<8x128xf32>
    %16 = vector.broadcast %14 : vector<1x128xf32> to vector<8x128xf32>
    %17 = arith.addf %15, %16 : vector<8x128xf32>
    %18 = math.tanh %17 : vector<8x128xf32>
    %c0_15 = arith.constant 0 : index
    %c0_16 = arith.constant 0 : index
    %19 = vector.load %arg8[%c0_15, %c0_16] : memref<128x128xf32, #tpu.memory_space<vmem>>, vector<128x128xf32>
    %c0_17 = arith.constant 0 : index
    %c0_18 = arith.constant 0 : index
    %20 = vector.load %arg9[%c0_17, %c0_18] : memref<1x128xf32, #tpu.memory_space<vmem>>, vector<1x128xf32>
    %cst_19 = arith.constant dense<0.000000e+00> : vector<8x128xf32>
    %21 = tpu.matmul %18, %19, %cst_19 {dimension_numbers = #tpu.dot_dimension_numbers<[1], [0], [0], [1], [0, 0, 1, 1], [], []>} : vector<8x128xf32>, vector<128x128xf32>, vector<8x128xf32> -> vector<8x128xf32>
    %22 = vector.broadcast %20 : vector<1x128xf32> to vector<8x128xf32>
    %23 = arith.addf %21, %22 : vector<8x128xf32>
    %24 = math.tanh %23 : vector<8x128xf32>
    %c0_20 = arith.constant 0 : index
    %c0_21 = arith.constant 0 : index
    %25 = vector.load %arg10[%c0_20, %c0_21] : memref<128x128xf32, #tpu.memory_space<vmem>>, vector<128x128xf32>
    %c0_22 = arith.constant 0 : index
    %c0_23 = arith.constant 0 : index
    %26 = vector.load %arg11[%c0_22, %c0_23] : memref<1x128xf32, #tpu.memory_space<vmem>>, vector<1x128xf32>
    %cst_24 = arith.constant dense<0.000000e+00> : vector<8x128xf32>
    %27 = tpu.matmul %24, %25, %cst_24 {dimension_numbers = #tpu.dot_dimension_numbers<[1], [0], [0], [1], [0, 0, 1, 1], [], []>} : vector<8x128xf32>, vector<128x128xf32>, vector<8x128xf32> -> vector<8x128xf32>
    %28 = vector.broadcast %26 : vector<1x128xf32> to vector<8x128xf32>
    %29 = arith.addf %27, %28 : vector<8x128xf32>
    %c0_25 = arith.constant 0 : index
    %c0_26 = arith.constant 0 : index
    %30 = vector.load %arg12[%c0_25, %c0_26] : memref<128x128xf32, #tpu.memory_space<vmem>>, vector<128x128xf32>
    %c0_27 = arith.constant 0 : index
    %c0_28 = arith.constant 0 : index
    %31 = vector.load %arg13[%c0_27, %c0_28] : memref<1x128xf32, #tpu.memory_space<vmem>>, vector<1x128xf32>
    %cst_29 = arith.constant dense<0.000000e+00> : vector<8x128xf32>
    %32 = tpu.matmul %29, %30, %cst_29 {dimension_numbers = #tpu.dot_dimension_numbers<[1], [0], [0], [1], [0, 0, 1, 1], [], []>} : vector<8x128xf32>, vector<128x128xf32>, vector<8x128xf32> -> vector<8x128xf32>
    %33 = vector.broadcast %31 : vector<1x128xf32> to vector<8x128xf32>
    %34 = arith.addf %32, %33 : vector<8x128xf32>
    %35 = math.tanh %34 : vector<8x128xf32>
    %c0_30 = arith.constant 0 : index
    %c0_31 = arith.constant 0 : index
    %36 = vector.load %arg14[%c0_30, %c0_31] : memref<128x128xf32, #tpu.memory_space<vmem>>, vector<128x128xf32>
    %c0_32 = arith.constant 0 : index
    %c0_33 = arith.constant 0 : index
    %37 = vector.load %arg15[%c0_32, %c0_33] : memref<1x128xf32, #tpu.memory_space<vmem>>, vector<1x128xf32>
    %cst_34 = arith.constant dense<0.000000e+00> : vector<8x128xf32>
    %38 = tpu.matmul %35, %36, %cst_34 {dimension_numbers = #tpu.dot_dimension_numbers<[1], [0], [0], [1], [0, 0, 1, 1], [], []>} : vector<8x128xf32>, vector<128x128xf32>, vector<8x128xf32> -> vector<8x128xf32>
    %39 = vector.broadcast %37 : vector<1x128xf32> to vector<8x128xf32>
    %40 = arith.addf %38, %39 : vector<8x128xf32>
    %41 = math.tanh %40 : vector<8x128xf32>
    %c0_35 = arith.constant 0 : index
    %c0_36 = arith.constant 0 : index
    %42 = vector.load %arg16[%c0_35, %c0_36] : memref<128x128xf32, #tpu.memory_space<vmem>>, vector<128x128xf32>
    %c0_37 = arith.constant 0 : index
    %c0_38 = arith.constant 0 : index
    %43 = vector.load %arg17[%c0_37, %c0_38] : memref<1x128xf32, #tpu.memory_space<vmem>>, vector<1x128xf32>
    %cst_39 = arith.constant dense<0.000000e+00> : vector<8x128xf32>
    %44 = tpu.matmul %41, %42, %cst_39 {dimension_numbers = #tpu.dot_dimension_numbers<[1], [0], [0], [1], [0, 0, 1, 1], [], []>} : vector<8x128xf32>, vector<128x128xf32>, vector<8x128xf32> -> vector<8x128xf32>
    %45 = vector.broadcast %43 : vector<1x128xf32> to vector<8x128xf32>
    %46 = arith.addf %44, %45 : vector<8x128xf32>
    %47 = math.tanh %46 : vector<8x128xf32>
    %c0_40 = arith.constant 0 : index
    %c0_41 = arith.constant 0 : index
    %48 = vector.load %arg18[%c0_40, %c0_41] : memref<128x128xf32, #tpu.memory_space<vmem>>, vector<128x128xf32>
    %c0_42 = arith.constant 0 : index
    %c0_43 = arith.constant 0 : index
    %49 = vector.load %arg19[%c0_42, %c0_43] : memref<1x128xf32, #tpu.memory_space<vmem>>, vector<1x128xf32>
    %cst_44 = arith.constant dense<0.000000e+00> : vector<8x128xf32>
    %50 = tpu.matmul %47, %48, %cst_44 {dimension_numbers = #tpu.dot_dimension_numbers<[1], [0], [0], [1], [0, 0, 1, 1], [], []>} : vector<8x128xf32>, vector<128x128xf32>, vector<8x128xf32> -> vector<8x128xf32>
    %51 = vector.broadcast %49 : vector<1x128xf32> to vector<8x128xf32>
    %52 = arith.addf %50, %51 : vector<8x128xf32>
    %53 = math.tanh %52 : vector<8x128xf32>
    %c0_45 = arith.constant 0 : index
    %c0_46 = arith.constant 0 : index
    %54 = vector.load %arg20[%c0_45, %c0_46] : memref<128x128xf32, #tpu.memory_space<vmem>>, vector<128x128xf32>
    %c0_47 = arith.constant 0 : index
    %c0_48 = arith.constant 0 : index
    %55 = vector.load %arg21[%c0_47, %c0_48] : memref<1x128xf32, #tpu.memory_space<vmem>>, vector<1x128xf32>
    %cst_49 = arith.constant dense<0.000000e+00> : vector<8x128xf32>
    %56 = tpu.matmul %53, %54, %cst_49 {dimension_numbers = #tpu.dot_dimension_numbers<[1], [0], [0], [1], [0, 0, 1, 1], [], []>} : vector<8x128xf32>, vector<128x128xf32>, vector<8x128xf32> -> vector<8x128xf32>
    %57 = vector.broadcast %55 : vector<1x128xf32> to vector<8x128xf32>
    %58 = arith.addf %56, %57 : vector<8x128xf32>
    %59 = math.tanh %58 : vector<8x128xf32>
    %c0_50 = arith.constant 0 : index
    %c0_51 = arith.constant 0 : index
    %60 = vector.load %arg22[%c0_50, %c0_51] : memref<8x128xf32, #tpu.memory_space<vmem>>, vector<8x128xf32>
    tpu.vector_store %arg22[%c0_50, %c0_51], %59 {strides = array<i32>} : memref<8x128xf32, #tpu.memory_space<vmem>>, vector<8x128xf32>,
    return
  }
  func.func @transform_0(%arg0: i32) -> (i32, i32) {
    %c0_i32 = arith.constant 0 : i32
    %c0_i32_0 = arith.constant 0 : i32
    return %arg0, %c0_i32 : i32, i32
  }
  func.func @transform_1(%arg0: i32) -> (i32, i32) {
    %c0_i32 = arith.constant 0 : i32
    %c0_i32_0 = arith.constant 0 : i32
    %c0_i32_1 = arith.constant 0 : i32
    return %c0_i32, %c0_i32_0 : i32, i32
  }
  func.func @transform_2(%arg0: i32) -> (i32, i32) {
    %c0_i32 = arith.constant 0 : i32
    %c0_i32_0 = arith.constant 0 : i32
    %c0_i32_1 = arith.constant 0 : i32
    return %c0_i32, %c0_i32_0 : i32, i32
  }
  func.func @transform_3(%arg0: i32) -> (i32, i32) {
    %c0_i32 = arith.constant 0 : i32
    %c0_i32_0 = arith.constant 0 : i32
    %c0_i32_1 = arith.constant 0 : i32
    return %c0_i32, %c0_i32_0 : i32, i32
  }
  func.func @transform_4(%arg0: i32) -> (i32, i32) {
    %c0_i32 = arith.constant 0 : i32
    %c0_i32_0 = arith.constant 0 : i32
    %c0_i32_1 = arith.constant 0 : i32
    return %c0_i32, %c0_i32_0 : i32, i32
  }
  func.func @transform_5(%arg0: i32) -> (i32, i32) {
    %c0_i32 = arith.constant 0 : i32
    %c0_i32_0 = arith.constant 0 : i32
    %c0_i32_1 = arith.constant 0 : i32
    return %c0_i32, %c0_i32_0 : i32, i32
  }
  func.func @transform_6(%arg0: i32) -> (i32, i32) {
    %c0_i32 = arith.constant 0 : i32
    %c0_i32_0 = arith.constant 0 : i32
    %c0_i32_1 = arith.constant 0 : i32
    return %c0_i32, %c0_i32_0 : i32, i32
  }
  func.func @transform_7(%arg0: i32) -> (i32, i32) {
    %c0_i32 = arith.constant 0 : i32
    %c0_i32_0 = arith.constant 0 : i32
    %c0_i32_1 = arith.constant 0 : i32
    return %c0_i32, %c0_i32_0 : i32, i32
  }
  func.func @transform_8(%arg0: i32) -> (i32, i32) {
    %c0_i32 = arith.constant 0 : i32
    %c0_i32_0 = arith.constant 0 : i32
    %c0_i32_1 = arith.constant 0 : i32
    return %c0_i32, %c0_i32_0 : i32, i32
  }
  func.func @transform_9(%arg0: i32) -> (i32, i32) {
    %c0_i32 = arith.constant 0 : i32
    %c0_i32_0 = arith.constant 0 : i32
    %c0_i32_1 = arith.constant 0 : i32
    return %c0_i32, %c0_i32_0 : i32, i32
  }
  func.func @transform_10(%arg0: i32) -> (i32, i32) {
    %c0_i32 = arith.constant 0 : i32
    %c0_i32_0 = arith.constant 0 : i32
    %c0_i32_1 = arith.constant 0 : i32
    return %c0_i32, %c0_i32_0 : i32, i32
  }
  func.func @transform_11(%arg0: i32) -> (i32, i32) {
    %c0_i32 = arith.constant 0 : i32
    %c0_i32_0 = arith.constant 0 : i32
    %c0_i32_1 = arith.constant 0 : i32
    return %c0_i32, %c0_i32_0 : i32, i32
  }
  func.func @transform_12(%arg0: i32) -> (i32, i32) {
    %c0_i32 = arith.constant 0 : i32
    %c0_i32_0 = arith.constant 0 : i32
    %c0_i32_1 = arith.constant 0 : i32
    return %c0_i32, %c0_i32_0 : i32, i32
  }
  func.func @transform_13(%arg0: i32) -> (i32, i32) {
    %c0_i32 = arith.constant 0 : i32
    %c0_i32_0 = arith.constant 0 : i32
    %c0_i32_1 = arith.constant 0 : i32
    return %c0_i32, %c0_i32_0 : i32, i32
  }
  func.func @transform_14(%arg0: i32) -> (i32, i32) {
    %c0_i32 = arith.constant 0 : i32
    %c0_i32_0 = arith.constant 0 : i32
    %c0_i32_1 = arith.constant 0 : i32
    return %c0_i32, %c0_i32_0 : i32, i32
  }
  func.func @transform_15(%arg0: i32) -> (i32, i32) {
    %c0_i32 = arith.constant 0 : i32
    %c0_i32_0 = arith.constant 0 : i32
    %c0_i32_1 = arith.constant 0 : i32
    return %c0_i32, %c0_i32_0 : i32, i32
  }
  func.func @transform_16(%arg0: i32) -> (i32, i32) {
    %c0_i32 = arith.constant 0 : i32
    %c0_i32_0 = arith.constant 0 : i32
    %c0_i32_1 = arith.constant 0 : i32
    return %c0_i32, %c0_i32_0 : i32, i32
  }
  func.func @transform_17(%arg0: i32) -> (i32, i32) {
    %c0_i32 = arith.constant 0 : i32
    %c0_i32_0 = arith.constant 0 : i32
    %c0_i32_1 = arith.constant 0 : i32
    return %c0_i32, %c0_i32_0 : i32, i32
  }
  func.func @transform_18(%arg0: i32) -> (i32, i32) {
    %c0_i32 = arith.constant 0 : i32
    %c0_i32_0 = arith.constant 0 : i32
    %c0_i32_1 = arith.constant 0 : i32
    return %c0_i32, %c0_i32_0 : i32, i32
  }
  func.func @transform_19(%arg0: i32) -> (i32, i32) {
    %c0_i32 = arith.constant 0 : i32
    %c0_i32_0 = arith.constant 0 : i32
    %c0_i32_1 = arith.constant 0 : i32
    return %c0_i32, %c0_i32_0 : i32, i32
  }
  func.func @transform_20(%arg0: i32) -> (i32, i32) {
    %c0_i32 = arith.constant 0 : i32
    %c0_i32_0 = arith.constant 0 : i32
    %c0_i32_1 = arith.constant 0 : i32
    return %c0_i32, %c0_i32_0 : i32, i32
  }
  func.func @transform_21(%arg0: i32) -> (i32, i32) {
    %c0_i32 = arith.constant 0 : i32
    %c0_i32_0 = arith.constant 0 : i32
    return %arg0, %c0_i32 : i32, i32
  }
}

</mosaic_0001>

<llo_original>
// kernel: tpu_custom_call.1
$region0: #{tpu_custom_call.1}
  #allocation0 [shape = 'u32[]', space=smem, size = 0x4, offset = 0x4, fixed_abs, tag = 'smem constant byte address 0x4 - core index']
  #allocation1 [shape = 'u32[144,128]{1,0:T(1,128)}', space=vmem, size = 0x12000, scoped, tag = 'internal scratch']
  %s0 = inlined_call_operand.hbm [shape: f32[8,128], index: 0, kind: input, shape index: {}]
  %s1 = inlined_call_operand.hbm [shape: f32[128,128], index: 1, kind: input, shape index: {}]
  %s2 = inlined_call_operand.vmem [shape: f32[1,128], index: 2, kind: input, shape index: {}]
  %s3 = inlined_call_operand.hbm [shape: f32[128,128], index: 3, kind: input, shape index: {}]
  %s4 = inlined_call_operand.vmem [shape: f32[1,128], index: 4, kind: input, shape index: {}]
  %s5 = inlined_call_operand.hbm [shape: f32[128,128], index: 5, kind: input, shape index: {}]
  %s6 = inlined_call_operand.vmem [shape: f32[1,128], index: 6, kind: input, shape index: {}]
  %s7 = inlined_call_operand.hbm [shape: f32[128,128], index: 7, kind: input, shape index: {}]
  %s8 = inlined_call_operand.vmem [shape: f32[1,128], index: 8, kind: input, shape index: {}]
  %s9 = inlined_call_operand.hbm [shape: f32[128,128], index: 9, kind: input, shape index: {}]
  %s10 = inlined_call_operand.vmem [shape: f32[1,128], index: 10, kind: input, shape index: {}]
  %s11 = inlined_call_operand.hbm [shape: f32[128,128], index: 11, kind: input, shape index: {}]
  %s12 = inlined_call_operand.vmem [shape: f32[1,128], index: 12, kind: input, shape index: {}]
  %s13 = inlined_call_operand.hbm [shape: f32[128,128], index: 13, kind: input, shape index: {}]
  %s14 = inlined_call_operand.vmem [shape: f32[1,128], index: 14, kind: input, shape index: {}]
  %s15 = inlined_call_operand.hbm [shape: f32[128,128], index: 15, kind: input, shape index: {}]
  %s16 = inlined_call_operand.vmem [shape: f32[1,128], index: 16, kind: input, shape index: {}]
  %s17 = inlined_call_operand.hbm [shape: f32[128,128], index: 17, kind: input, shape index: {}]
  %s18 = inlined_call_operand.vmem [shape: f32[1,128], index: 18, kind: input, shape index: {}]
  %s19 = inlined_call_operand.hbm [shape: f32[128,128], index: 19, kind: input, shape index: {}]
  %s20 = inlined_call_operand.vmem [shape: f32[1,128], index: 20, kind: input, shape index: {}]
  %s21 = inlined_call_operand.hbm [shape: f32[8,128], index: 21, kind: output, shape index: {}]
  %s22 = sld [smem:[#allocation0]]
  $region138: #{tpu_custom_call.1} parent=0
    _
  %s24 = ssub.s32 1, %s22
  %s25 = scalar_select 0, %s24, %s22
  $region1: #{tpu_custom_call.1} parent=0
    #allocation2 [shape = 'u8[4096]{0}', space=vmem, size = 0x1000, scoped, tag = 'input window, operand 0, single buffered']
    #allocation3 [shape = 's32[1]{0}', space=sflag, size = 0x4, scoped, tag = 'scoped memory for tpu_custom_call.1']
    #allocation4 [shape = 's32[1]{0}', space=sflag, size = 0x4, scoped, tag = 'scoped memory for tpu_custom_call.1']
    #allocation5 [shape = 'u8[65536]{0}', space=vmem, size = 0x10000, scoped, tag = 'input window, operand 1, single buffered']
    #allocation6 [shape = 's32[1]{0}', space=sflag, size = 0x4, scoped, tag = 'scoped memory for tpu_custom_call.1']
    #allocation7 [shape = 'u8[65536]{0}', space=vmem, size = 0x10000, scoped, tag = 'input window, operand 3, single buffered']
    #allocation8 [shape = 'u8[65536]{0}', space=vmem, size = 0x10000, scoped, tag = 'input window, operand 5, single buffered']
    #allocation9 [shape = 's32[1]{0}', space=sflag, size = 0x4, scoped, tag = 'scoped memory for tpu_custom_call.1']
    #allocation10 [shape = 'u8[65536]{0}', space=vmem, size = 0x10000, scoped, tag = 'input window, operand 7, single buffered']
    #allocation11 [shape = 'u8[65536]{0}', space=vmem, size = 0x10000, scoped, tag = 'input window, operand 9, single buffered']
    #allocation12 [shape = 's32[1]{0}', space=sflag, size = 0x4, scoped, tag = 'scoped memory for tpu_custom_call.1']
    #allocation13 [shape = 'u8[65536]{0}', space=vmem, size = 0x10000, scoped, tag = 'input window, operand 11, single buffered']
    #allocation14 [shape = 'u8[65536]{0}', space=vmem, size = 0x10000, scoped, tag = 'input window, operand 13, single buffered']
    #allocation15 [shape = 's32[1]{0}', space=sflag, size = 0x4, scoped, tag = 'scoped memory for tpu_custom_call.1']
    #allocation16 [shape = 'u8[65536]{0}', space=vmem, size = 0x10000, scoped, tag = 'input window, operand 15, single buffered']
    #allocation17 [shape = 'u8[65536]{0}', space=vmem, size = 0x10000, scoped, tag = 'input window, operand 17, single buffered']
    #allocation18 [shape = 's32[1]{0}', space=sflag, size = 0x4, scoped, tag = 'scoped memory for tpu_custom_call.1']
    #allocation19 [shape = 'u8[65536]{0}', space=vmem, size = 0x10000, scoped, tag = 'input window, operand 19, single buffered']
    #allocation20 [shape = 'u8[4096]{0}', space=vmem, size = 0x1000, scoped, tag = 'output window, operand 0, single buffered']
    %26 = vsyncpa [#allocation3], 0
    %27 = vsyncpa [#allocation6], 0
    %28 = vsyncpa [#allocation9], 0
    %29 = vsyncpa [#allocation12], 0
    %30 = vsyncpa [#allocation15], 0
    %31 = vsyncpa [#allocation18], 0
    %32 = vsyncpa [#allocation4], 0
    // Predicated region
    $region2: #{tpu_custom_call.1} parent=1 // pred_check
      _
    $region3: #{tpu_custom_call.1} parent=1 // pred_check_branch
      %34 = sbr.rel (0) target = $region5
    $region4: #{tpu_custom_call.1} parent=1 // pred_region
      %s36 = ssub.s32 128, 128
      %37 = vsyncadd [#allocation3], %s36
      %s39 = sshll.u32 [#allocation2], 4
      %s40 = int_to_ptr.vmem [resolvable:$true] %s39
      %42 = dma.hbm_to_vmem [thread:$0]  %s0, 128, %s40, [#allocation3]
    $region5: #{tpu_custom_call.1} parent=1 // pred_fallthru
      _
    // Predicated region
    $region6: #{tpu_custom_call.1} parent=1 // pred_check
      _
    $region7: #{tpu_custom_call.1} parent=1 // pred_check_branch
      %44 = sbr.rel (0) target = $region9
    $region8: #{tpu_custom_call.1} parent=1 // pred_region
      %s46 = ssub.s32 2048, 2048
      %47 = vsyncadd [#allocation6], %s46
      %s48 = sshll.u32 [#allocation5], 4
      %s49 = int_to_ptr.vmem [resolvable:$true] %s48
      %54 = dma.hbm_to_vmem [thread:$0]  %s1, 2048, %s49, [#allocation6], 128, 128, 8
    $region9: #{tpu_custom_call.1} parent=1 // pred_fallthru
      _
    // Predicated region
    $region10: #{tpu_custom_call.1} parent=1 // pred_check
      _
    $region11: #{tpu_custom_call.1} parent=1 // pred_check_branch
      %56 = sbr.rel (0) target = $region13
    $region12: #{tpu_custom_call.1} parent=1 // pred_region
      _
    $region13: #{tpu_custom_call.1} parent=1 // pred_fallthru
      _
    // Predicated region
    $region14: #{tpu_custom_call.1} parent=1 // pred_check
      _
    $region15: #{tpu_custom_call.1} parent=1 // pred_check_branch
      %58 = sbr.rel (0) target = $region17
    $region16: #{tpu_custom_call.1} parent=1 // pred_region
      %s60 = ssub.s32 2048, 2048
      %61 = vsyncadd [#allocation6], %s60
      %s62 = sshll.u32 [#allocation7], 4
      %s63 = int_to_ptr.vmem [resolvable:$true] %s62
      %68 = dma.hbm_to_vmem [thread:$0]  %s3, 2048, %s63, [#allocation6], 128, 128, 8
    $region17: #{tpu_custom_call.1} parent=1 // pred_fallthru
      _
    // Predicated region
    $region18: #{tpu_custom_call.1} parent=1 // pred_check
      _
    $region19: #{tpu_custom_call.1} parent=1 // pred_check_branch
      %70 = sbr.rel (0) target = $region21
    $region20: #{tpu_custom_call.1} parent=1 // pred_region
      _
    $region21: #{tpu_custom_call.1} parent=1 // pred_fallthru
      _
    // Predicated region
    $region22: #{tpu_custom_call.1} parent=1 // pred_check
      _
    $region23: #{tpu_custom_call.1} parent=1 // pred_check_branch
      %72 = sbr.rel (0) target = $region25
    $region24: #{tpu_custom_call.1} parent=1 // pred_region
      %s74 = ssub.s32 2048, 2048
      %75 = vsyncadd [#allocation9], %s74
      %s76 = sshll.u32 [#allocation8], 4
      %s77 = int_to_ptr.vmem [resolvable:$true] %s76
      %82 = dma.hbm_to_vmem [thread:$0]  %s5, 2048, %s77, [#allocation9], 128, 128, 8
    $region25: #{tpu_custom_call.1} parent=1 // pred_fallthru
      _
    // Predicated region
    $region26: #{tpu_custom_call.1} parent=1 // pred_check
      _
    $region27: #{tpu_custom_call.1} parent=1 // pred_check_branch
      %84 = sbr.rel (0) target = $region29
    $region28: #{tpu_custom_call.1} parent=1 // pred_region
      _
    $region29: #{tpu_custom_call.1} parent=1 // pred_fallthru
      _
    // Predicated region
    $region30: #{tpu_custom_call.1} parent=1 // pred_check
      _
    $region31: #{tpu_custom_call.1} parent=1 // pred_check_branch
      %86 = sbr.rel (0) target = $region33
    $region32: #{tpu_custom_call.1} parent=1 // pred_region
      %s88 = ssub.s32 2048, 2048
      %89 = vsyncadd [#allocation9], %s88
      %s90 = sshll.u32 [#allocation10], 4
      %s91 = int_to_ptr.vmem [resolvable:$true] %s90
      %96 = dma.hbm_to_vmem [thread:$0]  %s7, 2048, %s91, [#allocation9], 128, 128, 8
    $region33: #{tpu_custom_call.1} parent=1 // pred_fallthru
      _
    // Predicated region
    $region34: #{tpu_custom_call.1} parent=1 // pred_check
      _
    $region35: #{tpu_custom_call.1} parent=1 // pred_check_branch
      %98 = sbr.rel (0) target = $region37
    $region36: #{tpu_custom_call.1} parent=1 // pred_region
      _
    $region37: #{tpu_custom_call.1} parent=1 // pred_fallthru
      _
    // Predicated region
    $region38: #{tpu_custom_call.1} parent=1 // pred_check
      _
    $region39: #{tpu_custom_call.1} parent=1 // pred_check_branch
      %100 = sbr.rel (0) target = $region41
    $region40: #{tpu_custom_call.1} parent=1 // pred_region
      %s102 = ssub.s32 2048, 2048
      %103 = vsyncadd [#allocation12], %s102
      %s104 = sshll.u32 [#allocation11], 4
      %s105 = int_to_ptr.vmem [resolvable:$true] %s104
      %110 = dma.hbm_to_vmem [thread:$0]  %s9, 2048, %s105, [#allocation12], 128, 128, 8
    $region41: #{tpu_custom_call.1} parent=1 // pred_fallthru
      _
    // Predicated region
    $region42: #{tpu_custom_call.1} parent=1 // pred_check
      _
    $region43: #{tpu_custom_call.1} parent=1 // pred_check_branch
      %112 = sbr.rel (0) target = $region45
    $region44: #{tpu_custom_call.1} parent=1 // pred_region
      _
    $region45: #{tpu_custom_call.1} parent=1 // pred_fallthru
      _
    // Predicated region
    $region46: #{tpu_custom_call.1} parent=1 // pred_check
      _
    $region47: #{tpu_custom_call.1} parent=1 // pred_check_branch
      %114 = sbr.rel (0) target = $region49
    $region48: #{tpu_custom_call.1} parent=1 // pred_region
      %s116 = ssub.s32 2048, 2048
      %117 = vsyncadd [#allocation12], %s116
      %s118 = sshll.u32 [#allocation13], 4
      %s119 = int_to_ptr.vmem [resolvable:$true] %s118
      %124 = dma.hbm_to_vmem [thread:$0]  %s11, 2048, %s119, [#allocation12], 128, 128, 8
    $region49: #{tpu_custom_call.1} parent=1 // pred_fallthru
      _
    // Predicated region
    $region50: #{tpu_custom_call.1} parent=1 // pred_check
      _
    $region51: #{tpu_custom_call.1} parent=1 // pred_check_branch
      %126 = sbr.rel (0) target = $region53
    $region52: #{tpu_custom_call.1} parent=1 // pred_region
      _
    $region53: #{tpu_custom_call.1} parent=1 // pred_fallthru
      _
    // Predicated region
    $region54: #{tpu_custom_call.1} parent=1 // pred_check
      _
    $region55: #{tpu_custom_call.1} parent=1 // pred_check_branch
      %128 = sbr.rel (0) target = $region57
    $region56: #{tpu_custom_call.1} parent=1 // pred_region
      %s130 = ssub.s32 2048, 2048
      %131 = vsyncadd [#allocation15], %s130
      %s132 = sshll.u32 [#allocation14], 4
      %s133 = int_to_ptr.vmem [resolvable:$true] %s132
      %138 = dma.hbm_to_vmem [thread:$0]  %s13, 2048, %s133, [#allocation15], 128, 128, 8
    $region57: #{tpu_custom_call.1} parent=1 // pred_fallthru
      _
    // Predicated region
    $region58: #{tpu_custom_call.1} parent=1 // pred_check
      _
    $region59: #{tpu_custom_call.1} parent=1 // pred_check_branch
      %140 = sbr.rel (0) target = $region61
    $region60: #{tpu_custom_call.1} parent=1 // pred_region
      _
    $region61: #{tpu_custom_call.1} parent=1 // pred_fallthru
      _
    // Predicated region
    $region62: #{tpu_custom_call.1} parent=1 // pred_check
      _
    $region63: #{tpu_custom_call.1} parent=1 // pred_check_branch
      %142 = sbr.rel (0) target = $region65
    $region64: #{tpu_custom_call.1} parent=1 // pred_region
      %s144 = ssub.s32 2048, 2048
      %145 = vsyncadd [#allocation15], %s144
      %s146 = sshll.u32 [#allocation16], 4
      %s147 = int_to_ptr.vmem [resolvable:$true] %s146
      %152 = dma.hbm_to_vmem [thread:$0]  %s15, 2048, %s147, [#allocation15], 128, 128, 8
    $region65: #{tpu_custom_call.1} parent=1 // pred_fallthru
      _
    // Predicated region
    $region66: #{tpu_custom_call.1} parent=1 // pred_check
      _
    $region67: #{tpu_custom_call.1} parent=1 // pred_check_branch
      %154 = sbr.rel (0) target = $region69
    $region68: #{tpu_custom_call.1} parent=1 // pred_region
      _
    $region69: #{tpu_custom_call.1} parent=1 // pred_fallthru
      _
    // Predicated region
    $region70: #{tpu_custom_call.1} parent=1 // pred_check
      _
    $region71: #{tpu_custom_call.1} parent=1 // pred_check_branch
      %156 = sbr.rel (0) target = $region73
    $region72: #{tpu_custom_call.1} parent=1 // pred_region
      %s158 = ssub.s32 2048, 2048
      %159 = vsyncadd [#allocation18], %s158
      %s160 = sshll.u32 [#allocation17], 4
      %s161 = int_to_ptr.vmem [resolvable:$true] %s160
      %166 = dma.hbm_to_vmem [thread:$0]  %s17, 2048, %s161, [#allocation18], 128, 128, 8
    $region73: #{tpu_custom_call.1} parent=1 // pred_fallthru
      _
    // Predicated region
    $region74: #{tpu_custom_call.1} parent=1 // pred_check
      _
    $region75: #{tpu_custom_call.1} parent=1 // pred_check_branch
      %168 = sbr.rel (0) target = $region77
    $region76: #{tpu_custom_call.1} parent=1 // pred_region
      _
    $region77: #{tpu_custom_call.1} parent=1 // pred_fallthru
      _
    // Predicated region
    $region78: #{tpu_custom_call.1} parent=1 // pred_check
      _
    $region79: #{tpu_custom_call.1} parent=1 // pred_check_branch
      %170 = sbr.rel (0) target = $region81
    $region80: #{tpu_custom_call.1} parent=1 // pred_region
      %s172 = ssub.s32 2048, 2048
      %173 = vsyncadd [#allocation18], %s172
      %s174 = sshll.u32 [#allocation19], 4
      %s175 = int_to_ptr.vmem [resolvable:$true] %s174
      %180 = dma.hbm_to_vmem [thread:$0]  %s19, 2048, %s175, [#allocation18], 128, 128, 8
    $region81: #{tpu_custom_call.1} parent=1 // pred_fallthru
      _
    // Predicated region
    $region82: #{tpu_custom_call.1} parent=1 // pred_check
      _
    $region83: #{tpu_custom_call.1} parent=1 // pred_check_branch
      %182 = sbr.rel (0) target = $region85
    $region84: #{tpu_custom_call.1} parent=1 // pred_region
      _
    $region85: #{tpu_custom_call.1} parent=1 // pred_fallthru
      _
    // Predicated region
    $region86: #{tpu_custom_call.1} parent=1 // pred_check
      _
    $region87: #{tpu_custom_call.1} parent=1 // pred_check_branch
      %184 = sbr.rel (0) target = $region89
    $region88: #{tpu_custom_call.1} parent=1 // pred_region
      %185 = dma.done [#allocation3], 128
    $region89: #{tpu_custom_call.1} parent=1 // pred_fallthru
      _
    // Predicated region
    $region90: #{tpu_custom_call.1} parent=1 // pred_check
      _
    $region91: #{tpu_custom_call.1} parent=1 // pred_check_branch
      %187 = sbr.rel (0) target = $region93
    $region92: #{tpu_custom_call.1} parent=1 // pred_region
      %188 = dma.done [#allocation6], 2048
    $region93: #{tpu_custom_call.1} parent=1 // pred_fallthru
      _
    // Predicated region
    $region94: #{tpu_custom_call.1} parent=1 // pred_check
      _
    $region95: #{tpu_custom_call.1} parent=1 // pred_check_branch
      %190 = sbr.rel (0) target = $region97
    $region96: #{tpu_custom_call.1} parent=1 // pred_region
      %191 = dma.done [#allocation6], 2048
    $region97: #{tpu_custom_call.1} parent=1 // pred_fallthru
      _
    // Predicated region
    $region98: #{tpu_custom_call.1} parent=1 // pred_check
      _
    $region99: #{tpu_custom_call.1} parent=1 // pred_check_branch
      %193 = sbr.rel (0) target = $region101
    $region100: #{tpu_custom_call.1} parent=1 // pred_region
      %194 = dma.done [#allocation9], 2048
    $region101: #{tpu_custom_call.1} parent=1 // pred_fallthru
      _
    // Predicated region
    $region102: #{tpu_custom_call.1} parent=1 // pred_check
      _
    $region103: #{tpu_custom_call.1} parent=1 // pred_check_branch
      %196 = sbr.rel (0) target = $region105
    $region104: #{tpu_custom_call.1} parent=1 // pred_region
      %197 = dma.done [#allocation9], 2048
    $region105: #{tpu_custom_call.1} parent=1 // pred_fallthru
      _
    // Predicated region
    $region106: #{tpu_custom_call.1} parent=1 // pred_check
      _
    $region107: #{tpu_custom_call.1} parent=1 // pred_check_branch
      %199 = sbr.rel (0) target = $region109
    $region108: #{tpu_custom_call.1} parent=1 // pred_region
      %200 = dma.done [#allocation12], 2048
    $region109: #{tpu_custom_call.1} parent=1 // pred_fallthru
      _
    // Predicated region
    $region110: #{tpu_custom_call.1} parent=1 // pred_check
      _
    $region111: #{tpu_custom_call.1} parent=1 // pred_check_branch
      %202 = sbr.rel (0) target = $region113
    $region112: #{tpu_custom_call.1} parent=1 // pred_region
      %203 = dma.done [#allocation12], 2048
    $region113: #{tpu_custom_call.1} parent=1 // pred_fallthru
      _
    // Predicated region
    $region114: #{tpu_custom_call.1} parent=1 // pred_check
      _
    $region115: #{tpu_custom_call.1} parent=1 // pred_check_branch
      %205 = sbr.rel (0) target = $region117
    $region116: #{tpu_custom_call.1} parent=1 // pred_region
      %206 = dma.done [#allocation15], 2048
    $region117: #{tpu_custom_call.1} parent=1 // pred_fallthru
      _
    // Predicated region
    $region118: #{tpu_custom_call.1} parent=1 // pred_check
      _
    $region119: #{tpu_custom_call.1} parent=1 // pred_check_branch
      %208 = sbr.rel (0) target = $region121
    $region120: #{tpu_custom_call.1} parent=1 // pred_region
      %209 = dma.done [#allocation15], 2048
    $region121: #{tpu_custom_call.1} parent=1 // pred_fallthru
      _
    // Predicated region
    $region122: #{tpu_custom_call.1} parent=1 // pred_check
      _
    $region123: #{tpu_custom_call.1} parent=1 // pred_check_branch
      %211 = sbr.rel (0) target = $region125
    $region124: #{tpu_custom_call.1} parent=1 // pred_region
      %212 = dma.done [#allocation18], 2048
    $region125: #{tpu_custom_call.1} parent=1 // pred_fallthru
      _
    // Predicated region
    $region126: #{tpu_custom_call.1} parent=1 // pred_check
      _
    $region127: #{tpu_custom_call.1} parent=1 // pred_check_branch
      %214 = sbr.rel (0) target = $region129
    $region128: #{tpu_custom_call.1} parent=1 // pred_region
      %215 = dma.done [#allocation18], 2048
    $region129: #{tpu_custom_call.1} parent=1 // pred_fallthru
      _
    %v216 = vld [vmem:[#allocation2] sm:$0xff]
    %v217 = vld [vmem:[#allocation5] sm:$0xff]
    %v218 = vld [vmem:[#allocation5 + $0x8] sm:$0xff]
    %v219 = vld [vmem:[#allocation5 + $0x10] sm:$0xff]
    %v220 = vld [vmem:[#allocation5 + $0x18] sm:$0xff]
    %v221 = vld [vmem:[#allocation5 + $0x20] sm:$0xff]
    %v222 = vld [vmem:[#allocation5 + $0x28] sm:$0xff]
    %v223 = vld [vmem:[#allocation5 + $0x30] sm:$0xff]
    %v224 = vld [vmem:[#allocation5 + $0x38] sm:$0xff]
    %v225 = vld [vmem:[#allocation5 + $0x40] sm:$0xff]
    %v226 = vld [vmem:[#allocation5 + $0x48] sm:$0xff]
    %v227 = vld [vmem:[#allocation5 + $0x50] sm:$0xff]
    %v228 = vld [vmem:[#allocation5 + $0x58] sm:$0xff]
    %v229 = vld [vmem:[#allocation5 + $0x60] sm:$0xff]
    %v230 = vld [vmem:[#allocation5 + $0x68] sm:$0xff]
    %v231 = vld [vmem:[#allocation5 + $0x70] sm:$0xff]
    %v232 = vld [vmem:[#allocation5 + $0x78] sm:$0xff]
    %v233 = vld [vmem:[%s2] sm:$0x1]
    %v235 = vlaneseq
    %v236 = vshrl.u32 %v235, 7
    %v237 = vsub.s32 0, %v236
    %v238 = vrot.slane %v233, %v237
    %240 = vmatprep.subr.mxu0 0.0
    %241 = vmatpush1.msra.mxu0 %v217
    %242 = vmatprep.subr.mxu0 0.0
    %243 = vmatpush1.msra.mxu0 %v218
    %244 = vmatprep.subr.mxu0 0.0
    %245 = vmatpush1.msra.mxu0 %v219
    %246 = vmatprep.subr.mxu0 0.0
    %247 = vmatpush1.msra.mxu0 %v220
    %248 = vmatprep.subr.mxu0 0.0
    %249 = vmatpush1.msra.mxu0 %v221
    %250 = vmatprep.subr.mxu0 0.0
    %251 = vmatpush1.msra.mxu0 %v222
    %252 = vmatprep.subr.mxu0 0.0
    %253 = vmatpush1.msra.mxu0 %v223
    %254 = vmatprep.subr.mxu0 0.0
    %255 = vmatpush1.msra.mxu0 %v224
    %256 = vmatprep.subr.mxu0 0.0
    %257 = vmatpush1.msra.mxu0 %v225
    %258 = vmatprep.subr.mxu0 0.0
    %259 = vmatpush1.msra.mxu0 %v226
    %260 = vmatprep.subr.mxu0 0.0
    %261 = vmatpush1.msra.mxu0 %v227
    %262 = vmatprep.subr.mxu0 0.0
    %263 = vmatpush1.msra.mxu0 %v228
    %264 = vmatprep.subr.mxu0 0.0
    %265 = vmatpush1.msra.mxu0 %v229
    %266 = vmatprep.subr.mxu0 0.0
    %267 = vmatpush1.msra.mxu0 %v230
    %268 = vmatprep.subr.mxu0 0.0
    %269 = vmatpush1.msra.mxu0 %v231
    %270 = vmatprep.subr.mxu0 0.0
    %271 = vmatpush1.msra.mxu0 %v232
    %272 = vmatprep.subr.mxu0 0.0
    %273 = vmatpush1.msra.mxu0 0.0
    %274 = vmatprep.subr.mxu0 0.0
    %275 = vmatpush1.msra.mxu0 0.0
    %276 = vmatprep.subr.mxu0 0.0
    %277 = vmatpush1.msra.mxu0 0.0
    %278 = vmatprep.subr.mxu0 0.0
    %279 = vmatpush1.msra.mxu0 0.0
    %280 = vmatprep.subr.mxu0 0.0
    %281 = vmatpush1.msra.mxu0 0.0
    %282 = vmatprep.subr.mxu0 0.0
    %283 = vmatpush1.msra.mxu0 0.0
    %284 = vmatprep.subr.mxu0 0.0
    %285 = vmatpush1.msra.mxu0 0.0
    %286 = vmatprep.subr.mxu0 0.0
    %287 = vmatpush1.msra.mxu0 0.0
    %288 = vmatprep.subr.mxu0 0.0
    %289 = vmatpush1.msra.mxu0 0.0
    %290 = vmatprep.subr.mxu0 0.0
    %291 = vmatpush1.msra.mxu0 0.0
    %292 = vmatprep.subr.mxu0 0.0
    %293 = vmatpush1.msra.mxu0 0.0
    %294 = vmatprep.subr.mxu0 0.0
    %295 = vmatpush1.msra.mxu0 0.0
    %296 = vmatprep.subr.mxu0 0.0
    %297 = vmatpush1.msra.mxu0 0.0
    %298 = vmatprep.subr.mxu0 0.0
    %299 = vmatpush1.msra.mxu0 0.0
    %300 = vmatprep.subr.mxu0 0.0
    %301 = vmatpush1.msra.mxu0 0.0
    %302 = vmatprep.subr.mxu0 0.0
    %303 = vmatpush1.msra.mxu0 0.0
    %304 = vmatprep.mubr.f32.mxu0 0.0
    %305 = vmatmul.mubr.f32.gmra.mrb[0].mxu0 %v216
    %v306 = vpop.f32.mrb[0].mxu0
    %v307 = vadd.f32 %v238, %v306
    %v308 = vpop.f32.mrb[0].mxu0
    %309 = vdwg.mxu0
    %v310 = vtanh.pop %v307
    %v311 = vld [vmem:[#allocation7] sm:$0xff]
    %v312 = vld [vmem:[#allocation7 + $0x8] sm:$0xff]
    %v313 = vld [vmem:[#allocation7 + $0x10] sm:$0xff]
    %v314 = vld [vmem:[#allocation7 + $0x18] sm:$0xff]
    %v315 = vld [vmem:[#allocation7 + $0x20] sm:$0xff]
    %v316 = vld [vmem:[#allocation7 + $0x28] sm:$0xff]
    %v317 = vld [vmem:[#allocation7 + $0x30] sm:$0xff]
    %v318 = vld [vmem:[#allocation7 + $0x38] sm:$0xff]
    %v319 = vld [vmem:[#allocation7 + $0x40] sm:$0xff]
    %v320 = vld [vmem:[#allocation7 + $0x48] sm:$0xff]
    %v321 = vld [vmem:[#allocation7 + $0x50] sm:$0xff]
    %v322 = vld [vmem:[#allocation7 + $0x58] sm:$0xff]
    %v323 = vld [vmem:[#allocation7 + $0x60] sm:$0xff]
    %v324 = vld [vmem:[#allocation7 + $0x68] sm:$0xff]
    %v325 = vld [vmem:[#allocation7 + $0x70] sm:$0xff]
    %v326 = vld [vmem:[#allocation7 + $0x78] sm:$0xff]
    %v327 = vld [vmem:[%s4] sm:$0x1]
    %v329 = vlaneseq
    %v330 = vshrl.u32 %v329, 7
    %v331 = vsub.s32 0, %v330
    %v332 = vrot.slane %v327, %v331
    %334 = vmatprep.subr.mxu0 0.0
    %335 = vmatpush1.msra.mxu0 %v311
    %336 = vmatprep.subr.mxu0 0.0
    %337 = vmatpush1.msra.mxu0 %v312
    %338 = vmatprep.subr.mxu0 0.0
    %339 = vmatpush1.msra.mxu0 %v313
    %340 = vmatprep.subr.mxu0 0.0
    %341 = vmatpush1.msra.mxu0 %v314
    %342 = vmatprep.subr.mxu0 0.0
    %343 = vmatpush1.msra.mxu0 %v315
    %344 = vmatprep.subr.mxu0 0.0
    %345 = vmatpush1.msra.mxu0 %v316
    %346 = vmatprep.subr.mxu0 0.0
    %347 = vmatpush1.msra.mxu0 %v317
    %348 = vmatprep.subr.mxu0 0.0
    %349 = vmatpush1.msra.mxu0 %v318
    %350 = vmatprep.subr.mxu0 0.0
    %351 = vmatpush1.msra.mxu0 %v319
    %352 = vmatprep.subr.mxu0 0.0
    %353 = vmatpush1.msra.mxu0 %v320
    %354 = vmatprep.subr.mxu0 0.0
    %355 = vmatpush1.msra.mxu0 %v321
    %356 = vmatprep.subr.mxu0 0.0
    %357 = vmatpush1.msra.mxu0 %v322
    %358 = vmatprep.subr.mxu0 0.0
    %359 = vmatpush1.msra.mxu0 %v323
    %360 = vmatprep.subr.mxu0 0.0
    %361 = vmatpush1.msra.mxu0 %v324
    %362 = vmatprep.subr.mxu0 0.0
    %363 = vmatpush1.msra.mxu0 %v325
    %364 = vmatprep.subr.mxu0 0.0
    %365 = vmatpush1.msra.mxu0 %v326
    %366 = vmatprep.subr.mxu0 0.0
    %367 = vmatpush1.msra.mxu0 0.0
    %368 = vmatprep.subr.mxu0 0.0
    %369 = vmatpush1.msra.mxu0 0.0
    %370 = vmatprep.subr.mxu0 0.0
    %371 = vmatpush1.msra.mxu0 0.0
    %372 = vmatprep.subr.mxu0 0.0
    %373 = vmatpush1.msra.mxu0 0.0
    %374 = vmatprep.subr.mxu0 0.0
    %375 = vmatpush1.msra.mxu0 0.0
    %376 = vmatprep.subr.mxu0 0.0
    %377 = vmatpush1.msra.mxu0 0.0
    %378 = vmatprep.subr.mxu0 0.0
    %379 = vmatpush1.msra.mxu0 0.0
    %380 = vmatprep.subr.mxu0 0.0
    %381 = vmatpush1.msra.mxu0 0.0
    %382 = vmatprep.subr.mxu0 0.0
    %383 = vmatpush1.msra.mxu0 0.0
    %384 = vmatprep.subr.mxu0 0.0
    %385 = vmatpush1.msra.mxu0 0.0
    %386 = vmatprep.subr.mxu0 0.0
    %387 = vmatpush1.msra.mxu0 0.0
    %388 = vmatprep.subr.mxu0 0.0
    %389 = vmatpush1.msra.mxu0 0.0
    %390 = vmatprep.subr.mxu0 0.0
    %391 = vmatpush1.msra.mxu0 0.0
    %392 = vmatprep.subr.mxu0 0.0
    %393 = vmatpush1.msra.mxu0 0.0
    %394 = vmatprep.subr.mxu0 0.0
    %395 = vmatpush1.msra.mxu0 0.0
    %396 = vmatprep.subr.mxu0 0.0
    %397 = vmatpush1.msra.mxu0 0.0
    %398 = vmatprep.mubr.f32.mxu0 0.0
    %399 = vmatmul.mubr.f32.gmra.mrb[0].mxu0 %v310
    %v400 = vpop.f32.mrb[0].mxu0
    %v401 = vadd.f32 %v332, %v400
    %v402 = vpop.f32.mrb[0].mxu0
    %403 = vdwg.mxu0
    %v404 = vtanh.pop %v401
    %v405 = vld [vmem:[#allocation8] sm:$0xff]
    %v406 = vld [vmem:[#allocation8 + $0x8] sm:$0xff]
    %v407 = vld [vmem:[#allocation8 + $0x10] sm:$0xff]
    %v408 = vld [vmem:[#allocation8 + $0x18] sm:$0xff]
    %v409 = vld [vmem:[#allocation8 + $0x20] sm:$0xff]
    %v410 = vld [vmem:[#allocation8 + $0x28] sm:$0xff]
    %v411 = vld [vmem:[#allocation8 + $0x30] sm:$0xff]
    %v412 = vld [vmem:[#allocation8 + $0x38] sm:$0xff]
    %v413 = vld [vmem:[#allocation8 + $0x40] sm:$0xff]
    %v414 = vld [vmem:[#allocation8 + $0x48] sm:$0xff]
    %v415 = vld [vmem:[#allocation8 + $0x50] sm:$0xff]
    %v416 = vld [vmem:[#allocation8 + $0x58] sm:$0xff]
    %v417 = vld [vmem:[#allocation8 + $0x60] sm:$0xff]
    %v418 = vld [vmem:[#allocation8 + $0x68] sm:$0xff]
    %v419 = vld [vmem:[#allocation8 + $0x70] sm:$0xff]
    %v420 = vld [vmem:[#allocation8 + $0x78] sm:$0xff]
    %v421 = vld [vmem:[%s6] sm:$0x1]
    %v423 = vlaneseq
    %v424 = vshrl.u32 %v423, 7
    %v425 = vsub.s32 0, %v424
    %v426 = vrot.slane %v421, %v425
    %428 = vmatprep.subr.mxu0 0.0
    %429 = vmatpush1.msra.mxu0 %v405
    %430 = vmatprep.subr.mxu0 0.0
    %431 = vmatpush1.msra.mxu0 %v406
    %432 = vmatprep.subr.mxu0 0.0
    %433 = vmatpush1.msra.mxu0 %v407
    %434 = vmatprep.subr.mxu0 0.0
    %435 = vmatpush1.msra.mxu0 %v408
    %436 = vmatprep.subr.mxu0 0.0
    %437 = vmatpush1.msra.mxu0 %v409
    %438 = vmatprep.subr.mxu0 0.0
    %439 = vmatpush1.msra.mxu0 %v410
    %440 = vmatprep.subr.mxu0 0.0
    %441 = vmatpush1.msra.mxu0 %v411
    %442 = vmatprep.subr.mxu0 0.0
    %443 = vmatpush1.msra.mxu0 %v412
    %444 = vmatprep.subr.mxu0 0.0
    %445 = vmatpush1.msra.mxu0 %v413
    %446 = vmatprep.subr.mxu0 0.0
    %447 = vmatpush1.msra.mxu0 %v414
    %448 = vmatprep.subr.mxu0 0.0
    %449 = vmatpush1.msra.mxu0 %v415
    %450 = vmatprep.subr.mxu0 0.0
    %451 = vmatpush1.msra.mxu0 %v416
    %452 = vmatprep.subr.mxu0 0.0
    %453 = vmatpush1.msra.mxu0 %v417
    %454 = vmatprep.subr.mxu0 0.0
    %455 = vmatpush1.msra.mxu0 %v418
    %456 = vmatprep.subr.mxu0 0.0
    %457 = vmatpush1.msra.mxu0 %v419
    %458 = vmatprep.subr.mxu0 0.0
    %459 = vmatpush1.msra.mxu0 %v420
    %460 = vmatprep.subr.mxu0 0.0
    %461 = vmatpush1.msra.mxu0 0.0
    %462 = vmatprep.subr.mxu0 0.0
    %463 = vmatpush1.msra.mxu0 0.0
    %464 = vmatprep.subr.mxu0 0.0
    %465 = vmatpush1.msra.mxu0 0.0
    %466 = vmatprep.subr.mxu0 0.0
    %467 = vmatpush1.msra.mxu0 0.0
    %468 = vmatprep.subr.mxu0 0.0
    %469 = vmatpush1.msra.mxu0 0.0
    %470 = vmatprep.subr.mxu0 0.0
    %471 = vmatpush1.msra.mxu0 0.0
    %472 = vmatprep.subr.mxu0 0.0
    %473 = vmatpush1.msra.mxu0 0.0
    %474 = vmatprep.subr.mxu0 0.0
    %475 = vmatpush1.msra.mxu0 0.0
    %476 = vmatprep.subr.mxu0 0.0
    %477 = vmatpush1.msra.mxu0 0.0
    %478 = vmatprep.subr.mxu0 0.0
    %479 = vmatpush1.msra.mxu0 0.0
    %480 = vmatprep.subr.mxu0 0.0
    %481 = vmatpush1.msra.mxu0 0.0
    %482 = vmatprep.subr.mxu0 0.0
    %483 = vmatpush1.msra.mxu0 0.0
    %484 = vmatprep.subr.mxu0 0.0
    %485 = vmatpush1.msra.mxu0 0.0
    %486 = vmatprep.subr.mxu0 0.0
    %487 = vmatpush1.msra.mxu0 0.0
    %488 = vmatprep.subr.mxu0 0.0
    %489 = vmatpush1.msra.mxu0 0.0
    %490 = vmatprep.subr.mxu0 0.0
    %491 = vmatpush1.msra.mxu0 0.0
    %492 = vmatprep.mubr.f32.mxu0 0.0
    %493 = vmatmul.mubr.f32.gmra.mrb[0].mxu0 %v404
    %v494 = vpop.f32.mrb[0].mxu0
    %v495 = vadd.f32 %v426, %v494
    %v496 = vpop.f32.mrb[0].mxu0
    %497 = vdwg.mxu0
    %v498 = vtanh.pop %v495
    %v499 = vld [vmem:[#allocation10] sm:$0xff]
    %v500 = vld [vmem:[#allocation10 + $0x8] sm:$0xff]
    %v501 = vld [vmem:[#allocation10 + $0x10] sm:$0xff]
    %v502 = vld [vmem:[#allocation10 + $0x18] sm:$0xff]
    %v503 = vld [vmem:[#allocation10 + $0x20] sm:$0xff]
    %v504 = vld [vmem:[#allocation10 + $0x28] sm:$0xff]
    %v505 = vld [vmem:[#allocation10 + $0x30] sm:$0xff]
    %v506 = vld [vmem:[#allocation10 + $0x38] sm:$0xff]
    %v507 = vld [vmem:[#allocation10 + $0x40] sm:$0xff]
    %v508 = vld [vmem:[#allocation10 + $0x48] sm:$0xff]
    %v509 = vld [vmem:[#allocation10 + $0x50] sm:$0xff]
    %v510 = vld [vmem:[#allocation10 + $0x58] sm:$0xff]
    %v511 = vld [vmem:[#allocation10 + $0x60] sm:$0xff]
    %v512 = vld [vmem:[#allocation10 + $0x68] sm:$0xff]
    %v513 = vld [vmem:[#allocation10 + $0x70] sm:$0xff]
    %v514 = vld [vmem:[#allocation10 + $0x78] sm:$0xff]
    %v515 = vld [vmem:[%s8] sm:$0x1]
    %v517 = vlaneseq
    %v518 = vshrl.u32 %v517, 7
    %v519 = vsub.s32 0, %v518
    %v520 = vrot.slane %v515, %v519
    %522 = vmatprep.subr.mxu0 0.0
    %523 = vmatpush1.msra.mxu0 %v499
    %524 = vmatprep.subr.mxu0 0.0
    %525 = vmatpush1.msra.mxu0 %v500
    %526 = vmatprep.subr.mxu0 0.0
    %527 = vmatpush1.msra.mxu0 %v501
    %528 = vmatprep.subr.mxu0 0.0
    %529 = vmatpush1.msra.mxu0 %v502
    %530 = vmatprep.subr.mxu0 0.0
    %531 = vmatpush1.msra.mxu0 %v503
    %532 = vmatprep.subr.mxu0 0.0
    %533 = vmatpush1.msra.mxu0 %v504
    %534 = vmatprep.subr.mxu0 0.0
    %535 = vmatpush1.msra.mxu0 %v505
    %536 = vmatprep.subr.mxu0 0.0
    %537 = vmatpush1.msra.mxu0 %v506
    %538 = vmatprep.subr.mxu0 0.0
    %539 = vmatpush1.msra.mxu0 %v507
    %540 = vmatprep.subr.mxu0 0.0
    %541 = vmatpush1.msra.mxu0 %v508
    %542 = vmatprep.subr.mxu0 0.0
    %543 = vmatpush1.msra.mxu0 %v509
    %544 = vmatprep.subr.mxu0 0.0
    %545 = vmatpush1.msra.mxu0 %v510
    %546 = vmatprep.subr.mxu0 0.0
    %547 = vmatpush1.msra.mxu0 %v511
    %548 = vmatprep.subr.mxu0 0.0
    %549 = vmatpush1.msra.mxu0 %v512
    %550 = vmatprep.subr.mxu0 0.0
    %551 = vmatpush1.msra.mxu0 %v513
    %552 = vmatprep.subr.mxu0 0.0
    %553 = vmatpush1.msra.mxu0 %v514
    %554 = vmatprep.subr.mxu0 0.0
    %555 = vmatpush1.msra.mxu0 0.0
    %556 = vmatprep.subr.mxu0 0.0
    %557 = vmatpush1.msra.mxu0 0.0
    %558 = vmatprep.subr.mxu0 0.0
    %559 = vmatpush1.msra.mxu0 0.0
    %560 = vmatprep.subr.mxu0 0.0
    %561 = vmatpush1.msra.mxu0 0.0
    %562 = vmatprep.subr.mxu0 0.0
    %563 = vmatpush1.msra.mxu0 0.0
    %564 = vmatprep.subr.mxu0 0.0
    %565 = vmatpush1.msra.mxu0 0.0
    %566 = vmatprep.subr.mxu0 0.0
    %567 = vmatpush1.msra.mxu0 0.0
    %568 = vmatprep.subr.mxu0 0.0
    %569 = vmatpush1.msra.mxu0 0.0
    %570 = vmatprep.subr.mxu0 0.0
    %571 = vmatpush1.msra.mxu0 0.0
    %572 = vmatprep.subr.mxu0 0.0
    %573 = vmatpush1.msra.mxu0 0.0
    %574 = vmatprep.subr.mxu0 0.0
    %575 = vmatpush1.msra.mxu0 0.0
    %576 = vmatprep.subr.mxu0 0.0
    %577 = vmatpush1.msra.mxu0 0.0
    %578 = vmatprep.subr.mxu0 0.0
    %579 = vmatpush1.msra.mxu0 0.0
    %580 = vmatprep.subr.mxu0 0.0
    %581 = vmatpush1.msra.mxu0 0.0
    %582 = vmatprep.subr.mxu0 0.0
    %583 = vmatpush1.msra.mxu0 0.0
    %584 = vmatprep.subr.mxu0 0.0
    %585 = vmatpush1.msra.mxu0 0.0
    %586 = vmatprep.mubr.f32.mxu0 0.0
    %587 = vmatmul.mubr.f32.gmra.mrb[0].mxu0 %v498
    %v588 = vpop.f32.mrb[0].mxu0
    %v589 = vadd.f32 %v520, %v588
    %v590 = vpop.f32.mrb[0].mxu0
    %591 = vdwg.mxu0
    %v592 = vtanh.pop %v589
    %v593 = vld [vmem:[#allocation11] sm:$0xff]
    %v594 = vld [vmem:[#allocation11 + $0x8] sm:$0xff]
    %v595 = vld [vmem:[#allocation11 + $0x10] sm:$0xff]
    %v596 = vld [vmem:[#allocation11 + $0x18] sm:$0xff]
    %v597 = vld [vmem:[#allocation11 + $0x20] sm:$0xff]
    %v598 = vld [vmem:[#allocation11 + $0x28] sm:$0xff]
    %v599 = vld [vmem:[#allocation11 + $0x30] sm:$0xff]
    %v600 = vld [vmem:[#allocation11 + $0x38] sm:$0xff]
    %v601 = vld [vmem:[#allocation11 + $0x40] sm:$0xff]
    %v602 = vld [vmem:[#allocation11 + $0x48] sm:$0xff]
    %v603 = vld [vmem:[#allocation11 + $0x50] sm:$0xff]
    %v604 = vld [vmem:[#allocation11 + $0x58] sm:$0xff]
    %v605 = vld [vmem:[#allocation11 + $0x60] sm:$0xff]
    %v606 = vld [vmem:[#allocation11 + $0x68] sm:$0xff]
    %v607 = vld [vmem:[#allocation11 + $0x70] sm:$0xff]
    %v608 = vld [vmem:[#allocation11 + $0x78] sm:$0xff]
    %v609 = vld [vmem:[%s10] sm:$0x1]
    %v611 = vlaneseq
    %v612 = vshrl.u32 %v611, 7
    %v613 = vsub.s32 0, %v612
    %v614 = vrot.slane %v609, %v613
    %616 = vmatprep.subr.mxu0 0.0
    %617 = vmatpush1.msra.mxu0 %v593
    %618 = vmatprep.subr.mxu0 0.0
    %619 = vmatpush1.msra.mxu0 %v594
    %620 = vmatprep.subr.mxu0 0.0
    %621 = vmatpush1.msra.mxu0 %v595
    %622 = vmatprep.subr.mxu0 0.0
    %623 = vmatpush1.msra.mxu0 %v596
    %624 = vmatprep.subr.mxu0 0.0
    %625 = vmatpush1.msra.mxu0 %v597
    %626 = vmatprep.subr.mxu0 0.0
    %627 = vmatpush1.msra.mxu0 %v598
    %628 = vmatprep.subr.mxu0 0.0
    %629 = vmatpush1.msra.mxu0 %v599
    %630 = vmatprep.subr.mxu0 0.0
    %631 = vmatpush1.msra.mxu0 %v600
    %632 = vmatprep.subr.mxu0 0.0
    %633 = vmatpush1.msra.mxu0 %v601
    %634 = vmatprep.subr.mxu0 0.0
    %635 = vmatpush1.msra.mxu0 %v602
    %636 = vmatprep.subr.mxu0 0.0
    %637 = vmatpush1.msra.mxu0 %v603
    %638 = vmatprep.subr.mxu0 0.0
    %639 = vmatpush1.msra.mxu0 %v604
    %640 = vmatprep.subr.mxu0 0.0
    %641 = vmatpush1.msra.mxu0 %v605
    %642 = vmatprep.subr.mxu0 0.0
    %643 = vmatpush1.msra.mxu0 %v606
    %644 = vmatprep.subr.mxu0 0.0
    %645 = vmatpush1.msra.mxu0 %v607
    %646 = vmatprep.subr.mxu0 0.0
    %647 = vmatpush1.msra.mxu0 %v608
    %648 = vmatprep.subr.mxu0 0.0
    %649 = vmatpush1.msra.mxu0 0.0
    %650 = vmatprep.subr.mxu0 0.0
    %651 = vmatpush1.msra.mxu0 0.0
    %652 = vmatprep.subr.mxu0 0.0
    %653 = vmatpush1.msra.mxu0 0.0
    %654 = vmatprep.subr.mxu0 0.0
    %655 = vmatpush1.msra.mxu0 0.0
    %656 = vmatprep.subr.mxu0 0.0
    %657 = vmatpush1.msra.mxu0 0.0
    %658 = vmatprep.subr.mxu0 0.0
    %659 = vmatpush1.msra.mxu0 0.0
    %660 = vmatprep.subr.mxu0 0.0
    %661 = vmatpush1.msra.mxu0 0.0
    %662 = vmatprep.subr.mxu0 0.0
    %663 = vmatpush1.msra.mxu0 0.0
    %664 = vmatprep.subr.mxu0 0.0
    %665 = vmatpush1.msra.mxu0 0.0
    %666 = vmatprep.subr.mxu0 0.0
    %667 = vmatpush1.msra.mxu0 0.0
    %668 = vmatprep.subr.mxu0 0.0
    %669 = vmatpush1.msra.mxu0 0.0
    %670 = vmatprep.subr.mxu0 0.0
    %671 = vmatpush1.msra.mxu0 0.0
    %672 = vmatprep.subr.mxu0 0.0
    %673 = vmatpush1.msra.mxu0 0.0
    %674 = vmatprep.subr.mxu0 0.0
    %675 = vmatpush1.msra.mxu0 0.0
    %676 = vmatprep.subr.mxu0 0.0
    %677 = vmatpush1.msra.mxu0 0.0
    %678 = vmatprep.subr.mxu0 0.0
    %679 = vmatpush1.msra.mxu0 0.0
    %680 = vmatprep.mubr.f32.mxu0 0.0
    %681 = vmatmul.mubr.f32.gmra.mrb[0].mxu0 %v592
    %v682 = vpop.f32.mrb[0].mxu0
    %v683 = vadd.f32 %v614, %v682
    %v684 = vpop.f32.mrb[0].mxu0
    %685 = vdwg.mxu0
    %v686 = vld [vmem:[#allocation13] sm:$0xff]
    %v687 = vld [vmem:[#allocation13 + $0x8] sm:$0xff]
    %v688 = vld [vmem:[#allocation13 + $0x10] sm:$0xff]
    %v689 = vld [vmem:[#allocation13 + $0x18] sm:$0xff]
    %v690 = vld [vmem:[#allocation13 + $0x20] sm:$0xff]
    %v691 = vld [vmem:[#allocation13 + $0x28] sm:$0xff]
    %v692 = vld [vmem:[#allocation13 + $0x30] sm:$0xff]
    %v693 = vld [vmem:[#allocation13 + $0x38] sm:$0xff]
    %v694 = vld [vmem:[#allocation13 + $0x40] sm:$0xff]
    %v695 = vld [vmem:[#allocation13 + $0x48] sm:$0xff]
    %v696 = vld [vmem:[#allocation13 + $0x50] sm:$0xff]
    %v697 = vld [vmem:[#allocation13 + $0x58] sm:$0xff]
    %v698 = vld [vmem:[#allocation13 + $0x60] sm:$0xff]
    %v699 = vld [vmem:[#allocation13 + $0x68] sm:$0xff]
    %v700 = vld [vmem:[#allocation13 + $0x70] sm:$0xff]
    %v701 = vld [vmem:[#allocation13 + $0x78] sm:$0xff]
    %v702 = vld [vmem:[%s12] sm:$0x1]
    %v704 = vlaneseq
    %v705 = vshrl.u32 %v704, 7
    %v706 = vsub.s32 0, %v705
    %v707 = vrot.slane %v702, %v706
    %709 = vmatprep.subr.mxu0 0.0
    %710 = vmatpush1.msra.mxu0 %v686
    %711 = vmatprep.subr.mxu0 0.0
    %712 = vmatpush1.msra.mxu0 %v687
    %713 = vmatprep.subr.mxu0 0.0
    %714 = vmatpush1.msra.mxu0 %v688
    %715 = vmatprep.subr.mxu0 0.0
    %716 = vmatpush1.msra.mxu0 %v689
    %717 = vmatprep.subr.mxu0 0.0
    %718 = vmatpush1.msra.mxu0 %v690
    %719 = vmatprep.subr.mxu0 0.0
    %720 = vmatpush1.msra.mxu0 %v691
    %721 = vmatprep.subr.mxu0 0.0
    %722 = vmatpush1.msra.mxu0 %v692
    %723 = vmatprep.subr.mxu0 0.0
    %724 = vmatpush1.msra.mxu0 %v693
    %725 = vmatprep.subr.mxu0 0.0
    %726 = vmatpush1.msra.mxu0 %v694
    %727 = vmatprep.subr.mxu0 0.0
    %728 = vmatpush1.msra.mxu0 %v695
    %729 = vmatprep.subr.mxu0 0.0
    %730 = vmatpush1.msra.mxu0 %v696
    %731 = vmatprep.subr.mxu0 0.0
    %732 = vmatpush1.msra.mxu0 %v697
    %733 = vmatprep.subr.mxu0 0.0
    %734 = vmatpush1.msra.mxu0 %v698
    %735 = vmatprep.subr.mxu0 0.0
    %736 = vmatpush1.msra.mxu0 %v699
    %737 = vmatprep.subr.mxu0 0.0
    %738 = vmatpush1.msra.mxu0 %v700
    %739 = vmatprep.subr.mxu0 0.0
    %740 = vmatpush1.msra.mxu0 %v701
    %741 = vmatprep.subr.mxu0 0.0
    %742 = vmatpush1.msra.mxu0 0.0
    %743 = vmatprep.subr.mxu0 0.0
    %744 = vmatpush1.msra.mxu0 0.0
    %745 = vmatprep.subr.mxu0 0.0
    %746 = vmatpush1.msra.mxu0 0.0
    %747 = vmatprep.subr.mxu0 0.0
    %748 = vmatpush1.msra.mxu0 0.0
    %749 = vmatprep.subr.mxu0 0.0
    %750 = vmatpush1.msra.mxu0 0.0
    %751 = vmatprep.subr.mxu0 0.0
    %752 = vmatpush1.msra.mxu0 0.0
    %753 = vmatprep.subr.mxu0 0.0
    %754 = vmatpush1.msra.mxu0 0.0
    %755 = vmatprep.subr.mxu0 0.0
    %756 = vmatpush1.msra.mxu0 0.0
    %757 = vmatprep.subr.mxu0 0.0
    %758 = vmatpush1.msra.mxu0 0.0
    %759 = vmatprep.subr.mxu0 0.0
    %760 = vmatpush1.msra.mxu0 0.0
    %761 = vmatprep.subr.mxu0 0.0
    %762 = vmatpush1.msra.mxu0 0.0
    %763 = vmatprep.subr.mxu0 0.0
    %764 = vmatpush1.msra.mxu0 0.0
    %765 = vmatprep.subr.mxu0 0.0
    %766 = vmatpush1.msra.mxu0 0.0
    %767 = vmatprep.subr.mxu0 0.0
    %768 = vmatpush1.msra.mxu0 0.0
    %769 = vmatprep.subr.mxu0 0.0
    %770 = vmatpush1.msra.mxu0 0.0
    %771 = vmatprep.subr.mxu0 0.0
    %772 = vmatpush1.msra.mxu0 0.0
    %773 = vmatprep.mubr.f32.mxu0 0.0
    %774 = vmatmul.mubr.f32.gmra.mrb[0].mxu0 %v683
    %v775 = vpop.f32.mrb[0].mxu0
    %v776 = vadd.f32 %v707, %v775
    %v777 = vpop.f32.mrb[0].mxu0
    %778 = vdwg.mxu0
    %v779 = vtanh.pop %v776
    %v780 = vld [vmem:[#allocation14] sm:$0xff]
    %v781 = vld [vmem:[#allocation14 + $0x8] sm:$0xff]
    %v782 = vld [vmem:[#allocation14 + $0x10] sm:$0xff]
    %v783 = vld [vmem:[#allocation14 + $0x18] sm:$0xff]
    %v784 = vld [vmem:[#allocation14 + $0x20] sm:$0xff]
    %v785 = vld [vmem:[#allocation14 + $0x28] sm:$0xff]
    %v786 = vld [vmem:[#allocation14 + $0x30] sm:$0xff]
    %v787 = vld [vmem:[#allocation14 + $0x38] sm:$0xff]
    %v788 = vld [vmem:[#allocation14 + $0x40] sm:$0xff]
    %v789 = vld [vmem:[#allocation14 + $0x48] sm:$0xff]
    %v790 = vld [vmem:[#allocation14 + $0x50] sm:$0xff]
    %v791 = vld [vmem:[#allocation14 + $0x58] sm:$0xff]
    %v792 = vld [vmem:[#allocation14 + $0x60] sm:$0xff]
    %v793 = vld [vmem:[#allocation14 + $0x68] sm:$0xff]
    %v794 = vld [vmem:[#allocation14 + $0x70] sm:$0xff]
    %v795 = vld [vmem:[#allocation14 + $0x78] sm:$0xff]
    %v796 = vld [vmem:[%s14] sm:$0x1]
    %v798 = vlaneseq
    %v799 = vshrl.u32 %v798, 7
    %v800 = vsub.s32 0, %v799
    %v801 = vrot.slane %v796, %v800
    %803 = vmatprep.subr.mxu0 0.0
    %804 = vmatpush1.msra.mxu0 %v780
    %805 = vmatprep.subr.mxu0 0.0
    %806 = vmatpush1.msra.mxu0 %v781
    %807 = vmatprep.subr.mxu0 0.0
    %808 = vmatpush1.msra.mxu0 %v782
    %809 = vmatprep.subr.mxu0 0.0
    %810 = vmatpush1.msra.mxu0 %v783
    %811 = vmatprep.subr.mxu0 0.0
    %812 = vmatpush1.msra.mxu0 %v784
    %813 = vmatprep.subr.mxu0 0.0
    %814 = vmatpush1.msra.mxu0 %v785
    %815 = vmatprep.subr.mxu0 0.0
    %816 = vmatpush1.msra.mxu0 %v786
    %817 = vmatprep.subr.mxu0 0.0
    %818 = vmatpush1.msra.mxu0 %v787
    %819 = vmatprep.subr.mxu0 0.0
    %820 = vmatpush1.msra.mxu0 %v788
    %821 = vmatprep.subr.mxu0 0.0
    %822 = vmatpush1.msra.mxu0 %v789
    %823 = vmatprep.subr.mxu0 0.0
    %824 = vmatpush1.msra.mxu0 %v790
    %825 = vmatprep.subr.mxu0 0.0
    %826 = vmatpush1.msra.mxu0 %v791
    %827 = vmatprep.subr.mxu0 0.0
    %828 = vmatpush1.msra.mxu0 %v792
    %829 = vmatprep.subr.mxu0 0.0
    %830 = vmatpush1.msra.mxu0 %v793
    %831 = vmatprep.subr.mxu0 0.0
    %832 = vmatpush1.msra.mxu0 %v794
    %833 = vmatprep.subr.mxu0 0.0
    %834 = vmatpush1.msra.mxu0 %v795
    %835 = vmatprep.subr.mxu0 0.0
    %836 = vmatpush1.msra.mxu0 0.0
    %837 = vmatprep.subr.mxu0 0.0
    %838 = vmatpush1.msra.mxu0 0.0
    %839 = vmatprep.subr.mxu0 0.0
    %840 = vmatpush1.msra.mxu0 0.0
    %841 = vmatprep.subr.mxu0 0.0
    %842 = vmatpush1.msra.mxu0 0.0
    %843 = vmatprep.subr.mxu0 0.0
    %844 = vmatpush1.msra.mxu0 0.0
    %845 = vmatprep.subr.mxu0 0.0
    %846 = vmatpush1.msra.mxu0 0.0
    %847 = vmatprep.subr.mxu0 0.0
    %848 = vmatpush1.msra.mxu0 0.0
    %849 = vmatprep.subr.mxu0 0.0
    %850 = vmatpush1.msra.mxu0 0.0
    %851 = vmatprep.subr.mxu0 0.0
    %852 = vmatpush1.msra.mxu0 0.0
    %853 = vmatprep.subr.mxu0 0.0
    %854 = vmatpush1.msra.mxu0 0.0
    %855 = vmatprep.subr.mxu0 0.0
    %856 = vmatpush1.msra.mxu0 0.0
    %857 = vmatprep.subr.mxu0 0.0
    %858 = vmatpush1.msra.mxu0 0.0
    %859 = vmatprep.subr.mxu0 0.0
    %860 = vmatpush1.msra.mxu0 0.0
    %861 = vmatprep.subr.mxu0 0.0
    %862 = vmatpush1.msra.mxu0 0.0
    %863 = vmatprep.subr.mxu0 0.0
    %864 = vmatpush1.msra.mxu0 0.0
    %865 = vmatprep.subr.mxu0 0.0
    %866 = vmatpush1.msra.mxu0 0.0
    %867 = vmatprep.mubr.f32.mxu0 0.0
    %868 = vmatmul.mubr.f32.gmra.mrb[0].mxu0 %v779
    %v869 = vpop.f32.mrb[0].mxu0
    %v870 = vadd.f32 %v801, %v869
    %v871 = vpop.f32.mrb[0].mxu0
    %872 = vdwg.mxu0
    %v873 = vtanh.pop %v870
    %v874 = vld [vmem:[#allocation16] sm:$0xff]
    %v875 = vld [vmem:[#allocation16 + $0x8] sm:$0xff]
    %v876 = vld [vmem:[#allocation16 + $0x10] sm:$0xff]
    %v877 = vld [vmem:[#allocation16 + $0x18] sm:$0xff]
    %v878 = vld [vmem:[#allocation16 + $0x20] sm:$0xff]
    %v879 = vld [vmem:[#allocation16 + $0x28] sm:$0xff]
    %v880 = vld [vmem:[#allocation16 + $0x30] sm:$0xff]
    %v881 = vld [vmem:[#allocation16 + $0x38] sm:$0xff]
    %v882 = vld [vmem:[#allocation16 + $0x40] sm:$0xff]
    %v883 = vld [vmem:[#allocation16 + $0x48] sm:$0xff]
    %v884 = vld [vmem:[#allocation16 + $0x50] sm:$0xff]
    %v885 = vld [vmem:[#allocation16 + $0x58] sm:$0xff]
    %v886 = vld [vmem:[#allocation16 + $0x60] sm:$0xff]
    %v887 = vld [vmem:[#allocation16 + $0x68] sm:$0xff]
    %v888 = vld [vmem:[#allocation16 + $0x70] sm:$0xff]
    %v889 = vld [vmem:[#allocation16 + $0x78] sm:$0xff]
    %v890 = vld [vmem:[%s16] sm:$0x1]
    %v892 = vlaneseq
    %v893 = vshrl.u32 %v892, 7
    %v894 = vsub.s32 0, %v893
    %v895 = vrot.slane %v890, %v894
    %897 = vmatprep.subr.mxu0 0.0
    %898 = vmatpush1.msra.mxu0 %v874
    %899 = vmatprep.subr.mxu0 0.0
    %900 = vmatpush1.msra.mxu0 %v875
    %901 = vmatprep.subr.mxu0 0.0
    %902 = vmatpush1.msra.mxu0 %v876
    %903 = vmatprep.subr.mxu0 0.0
    %904 = vmatpush1.msra.mxu0 %v877
    %905 = vmatprep.subr.mxu0 0.0
    %906 = vmatpush1.msra.mxu0 %v878
    %907 = vmatprep.subr.mxu0 0.0
    %908 = vmatpush1.msra.mxu0 %v879
    %909 = vmatprep.subr.mxu0 0.0
    %910 = vmatpush1.msra.mxu0 %v880
    %911 = vmatprep.subr.mxu0 0.0
    %912 = vmatpush1.msra.mxu0 %v881
    %913 = vmatprep.subr.mxu0 0.0
    %914 = vmatpush1.msra.mxu0 %v882
    %915 = vmatprep.subr.mxu0 0.0
    %916 = vmatpush1.msra.mxu0 %v883
    %917 = vmatprep.subr.mxu0 0.0
    %918 = vmatpush1.msra.mxu0 %v884
    %919 = vmatprep.subr.mxu0 0.0
    %920 = vmatpush1.msra.mxu0 %v885
    %921 = vmatprep.subr.mxu0 0.0
    %922 = vmatpush1.msra.mxu0 %v886
    %923 = vmatprep.subr.mxu0 0.0
    %924 = vmatpush1.msra.mxu0 %v887
    %925 = vmatprep.subr.mxu0 0.0
    %926 = vmatpush1.msra.mxu0 %v888
    %927 = vmatprep.subr.mxu0 0.0
    %928 = vmatpush1.msra.mxu0 %v889
    %929 = vmatprep.subr.mxu0 0.0
    %930 = vmatpush1.msra.mxu0 0.0
    %931 = vmatprep.subr.mxu0 0.0
    %932 = vmatpush1.msra.mxu0 0.0
    %933 = vmatprep.subr.mxu0 0.0
    %934 = vmatpush1.msra.mxu0 0.0
    %935 = vmatprep.subr.mxu0 0.0
    %936 = vmatpush1.msra.mxu0 0.0
    %937 = vmatprep.subr.mxu0 0.0
    %938 = vmatpush1.msra.mxu0 0.0
    %939 = vmatprep.subr.mxu0 0.0
    %940 = vmatpush1.msra.mxu0 0.0
    %941 = vmatprep.subr.mxu0 0.0
    %942 = vmatpush1.msra.mxu0 0.0
    %943 = vmatprep.subr.mxu0 0.0
    %944 = vmatpush1.msra.mxu0 0.0
    %945 = vmatprep.subr.mxu0 0.0
    %946 = vmatpush1.msra.mxu0 0.0
    %947 = vmatprep.subr.mxu0 0.0
    %948 = vmatpush1.msra.mxu0 0.0
    %949 = vmatprep.subr.mxu0 0.0
    %950 = vmatpush1.msra.mxu0 0.0
    %951 = vmatprep.subr.mxu0 0.0
    %952 = vmatpush1.msra.mxu0 0.0
    %953 = vmatprep.subr.mxu0 0.0
    %954 = vmatpush1.msra.mxu0 0.0
    %955 = vmatprep.subr.mxu0 0.0
    %956 = vmatpush1.msra.mxu0 0.0
    %957 = vmatprep.subr.mxu0 0.0
    %958 = vmatpush1.msra.mxu0 0.0
    %959 = vmatprep.subr.mxu0 0.0
    %960 = vmatpush1.msra.mxu0 0.0
    %961 = vmatprep.mubr.f32.mxu0 0.0
    %962 = vmatmul.mubr.f32.gmra.mrb[0].mxu0 %v873
    %v963 = vpop.f32.mrb[0].mxu0
    %v964 = vadd.f32 %v895, %v963
    %v965 = vpop.f32.mrb[0].mxu0
    %966 = vdwg.mxu0
    %v967 = vtanh.pop %v964
    %v968 = vld [vmem:[#allocation17] sm:$0xff]
    %v969 = vld [vmem:[#allocation17 + $0x8] sm:$0xff]
    %v970 = vld [vmem:[#allocation17 + $0x10] sm:$0xff]
    %v971 = vld [vmem:[#allocation17 + $0x18] sm:$0xff]
    %v972 = vld [vmem:[#allocation17 + $0x20] sm:$0xff]
    %v973 = vld [vmem:[#allocation17 + $0x28] sm:$0xff]
    %v974 = vld [vmem:[#allocation17 + $0x30] sm:$0xff]
    %v975 = vld [vmem:[#allocation17 + $0x38] sm:$0xff]
    %v976 = vld [vmem:[#allocation17 + $0x40] sm:$0xff]
    %v977 = vld [vmem:[#allocation17 + $0x48] sm:$0xff]
    %v978 = vld [vmem:[#allocation17 + $0x50] sm:$0xff]
    %v979 = vld [vmem:[#allocation17 + $0x58] sm:$0xff]
    %v980 = vld [vmem:[#allocation17 + $0x60] sm:$0xff]
    %v981 = vld [vmem:[#allocation17 + $0x68] sm:$0xff]
    %v982 = vld [vmem:[#allocation17 + $0x70] sm:$0xff]
    %v983 = vld [vmem:[#allocation17 + $0x78] sm:$0xff]
    %v984 = vld [vmem:[%s18] sm:$0x1]
    %v986 = vlaneseq
    %v987 = vshrl.u32 %v986, 7
    %v988 = vsub.s32 0, %v987
    %v989 = vrot.slane %v984, %v988
    %991 = vmatprep.subr.mxu0 0.0
    %992 = vmatpush1.msra.mxu0 %v968
    %993 = vmatprep.subr.mxu0 0.0
    %994 = vmatpush1.msra.mxu0 %v969
    %995 = vmatprep.subr.mxu0 0.0
    %996 = vmatpush1.msra.mxu0 %v970
    %997 = vmatprep.subr.mxu0 0.0
    %998 = vmatpush1.msra.mxu0 %v971
    %999 = vmatprep.subr.mxu0 0.0
    %1000 = vmatpush1.msra.mxu0 %v972
    %1001 = vmatprep.subr.mxu0 0.0
    %1002 = vmatpush1.msra.mxu0 %v973
    %1003 = vmatprep.subr.mxu0 0.0
    %1004 = vmatpush1.msra.mxu0 %v974
    %1005 = vmatprep.subr.mxu0 0.0
    %1006 = vmatpush1.msra.mxu0 %v975
    %1007 = vmatprep.subr.mxu0 0.0
    %1008 = vmatpush1.msra.mxu0 %v976
    %1009 = vmatprep.subr.mxu0 0.0
    %1010 = vmatpush1.msra.mxu0 %v977
    %1011 = vmatprep.subr.mxu0 0.0
    %1012 = vmatpush1.msra.mxu0 %v978
    %1013 = vmatprep.subr.mxu0 0.0
    %1014 = vmatpush1.msra.mxu0 %v979
    %1015 = vmatprep.subr.mxu0 0.0
    %1016 = vmatpush1.msra.mxu0 %v980
    %1017 = vmatprep.subr.mxu0 0.0
    %1018 = vmatpush1.msra.mxu0 %v981
    %1019 = vmatprep.subr.mxu0 0.0
    %1020 = vmatpush1.msra.mxu0 %v982
    %1021 = vmatprep.subr.mxu0 0.0
    %1022 = vmatpush1.msra.mxu0 %v983
    %1023 = vmatprep.subr.mxu0 0.0
    %1024 = vmatpush1.msra.mxu0 0.0
    %1025 = vmatprep.subr.mxu0 0.0
    %1026 = vmatpush1.msra.mxu0 0.0
    %1027 = vmatprep.subr.mxu0 0.0
    %1028 = vmatpush1.msra.mxu0 0.0
    %1029 = vmatprep.subr.mxu0 0.0
    %1030 = vmatpush1.msra.mxu0 0.0
    %1031 = vmatprep.subr.mxu0 0.0
    %1032 = vmatpush1.msra.mxu0 0.0
    %1033 = vmatprep.subr.mxu0 0.0
    %1034 = vmatpush1.msra.mxu0 0.0
    %1035 = vmatprep.subr.mxu0 0.0
    %1036 = vmatpush1.msra.mxu0 0.0
    %1037 = vmatprep.subr.mxu0 0.0
    %1038 = vmatpush1.msra.mxu0 0.0
    %1039 = vmatprep.subr.mxu0 0.0
    %1040 = vmatpush1.msra.mxu0 0.0
    %1041 = vmatprep.subr.mxu0 0.0
    %1042 = vmatpush1.msra.mxu0 0.0
    %1043 = vmatprep.subr.mxu0 0.0
    %1044 = vmatpush1.msra.mxu0 0.0
    %1045 = vmatprep.subr.mxu0 0.0
    %1046 = vmatpush1.msra.mxu0 0.0
    %1047 = vmatprep.subr.mxu0 0.0
    %1048 = vmatpush1.msra.mxu0 0.0
    %1049 = vmatprep.subr.mxu0 0.0
    %1050 = vmatpush1.msra.mxu0 0.0
    %1051 = vmatprep.subr.mxu0 0.0
    %1052 = vmatpush1.msra.mxu0 0.0
    %1053 = vmatprep.subr.mxu0 0.0
    %1054 = vmatpush1.msra.mxu0 0.0
    %1055 = vmatprep.mubr.f32.mxu0 0.0
    %1056 = vmatmul.mubr.f32.gmra.mrb[0].mxu0 %v967
    %v1057 = vpop.f32.mrb[0].mxu0
    %v1058 = vadd.f32 %v989, %v1057
    %v1059 = vpop.f32.mrb[0].mxu0
    %1060 = vdwg.mxu0
    %v1061 = vtanh.pop %v1058
    %v1062 = vld [vmem:[#allocation19] sm:$0xff]
    %v1063 = vld [vmem:[#allocation19 + $0x8] sm:$0xff]
    %v1064 = vld [vmem:[#allocation19 + $0x10] sm:$0xff]
    %v1065 = vld [vmem:[#allocation19 + $0x18] sm:$0xff]
    %v1066 = vld [vmem:[#allocation19 + $0x20] sm:$0xff]
    %v1067 = vld [vmem:[#allocation19 + $0x28] sm:$0xff]
    %v1068 = vld [vmem:[#allocation19 + $0x30] sm:$0xff]
    %v1069 = vld [vmem:[#allocation19 + $0x38] sm:$0xff]
    %v1070 = vld [vmem:[#allocation19 + $0x40] sm:$0xff]
    %v1071 = vld [vmem:[#allocation19 + $0x48] sm:$0xff]
    %v1072 = vld [vmem:[#allocation19 + $0x50] sm:$0xff]
    %v1073 = vld [vmem:[#allocation19 + $0x58] sm:$0xff]
    %v1074 = vld [vmem:[#allocation19 + $0x60] sm:$0xff]
    %v1075 = vld [vmem:[#allocation19 + $0x68] sm:$0xff]
    %v1076 = vld [vmem:[#allocation19 + $0x70] sm:$0xff]
    %v1077 = vld [vmem:[#allocation19 + $0x78] sm:$0xff]
    %v1078 = vld [vmem:[%s20] sm:$0x1]
    %v1080 = vlaneseq
    %v1081 = vshrl.u32 %v1080, 7
    %v1082 = vsub.s32 0, %v1081
    %v1083 = vrot.slane %v1078, %v1082
    %1085 = vmatprep.subr.mxu0 0.0
    %1086 = vmatpush1.msra.mxu0 %v1062
    %1087 = vmatprep.subr.mxu0 0.0
    %1088 = vmatpush1.msra.mxu0 %v1063
    %1089 = vmatprep.subr.mxu0 0.0
    %1090 = vmatpush1.msra.mxu0 %v1064
    %1091 = vmatprep.subr.mxu0 0.0
    %1092 = vmatpush1.msra.mxu0 %v1065
    %1093 = vmatprep.subr.mxu0 0.0
    %1094 = vmatpush1.msra.mxu0 %v1066
    %1095 = vmatprep.subr.mxu0 0.0
    %1096 = vmatpush1.msra.mxu0 %v1067
    %1097 = vmatprep.subr.mxu0 0.0
    %1098 = vmatpush1.msra.mxu0 %v1068
    %1099 = vmatprep.subr.mxu0 0.0
    %1100 = vmatpush1.msra.mxu0 %v1069
    %1101 = vmatprep.subr.mxu0 0.0
    %1102 = vmatpush1.msra.mxu0 %v1070
    %1103 = vmatprep.subr.mxu0 0.0
    %1104 = vmatpush1.msra.mxu0 %v1071
    %1105 = vmatprep.subr.mxu0 0.0
    %1106 = vmatpush1.msra.mxu0 %v1072
    %1107 = vmatprep.subr.mxu0 0.0
    %1108 = vmatpush1.msra.mxu0 %v1073
    %1109 = vmatprep.subr.mxu0 0.0
    %1110 = vmatpush1.msra.mxu0 %v1074
    %1111 = vmatprep.subr.mxu0 0.0
    %1112 = vmatpush1.msra.mxu0 %v1075
    %1113 = vmatprep.subr.mxu0 0.0
    %1114 = vmatpush1.msra.mxu0 %v1076
    %1115 = vmatprep.subr.mxu0 0.0
    %1116 = vmatpush1.msra.mxu0 %v1077
    %1117 = vmatprep.subr.mxu0 0.0
    %1118 = vmatpush1.msra.mxu0 0.0
    %1119 = vmatprep.subr.mxu0 0.0
    %1120 = vmatpush1.msra.mxu0 0.0
    %1121 = vmatprep.subr.mxu0 0.0
    %1122 = vmatpush1.msra.mxu0 0.0
    %1123 = vmatprep.subr.mxu0 0.0
    %1124 = vmatpush1.msra.mxu0 0.0
    %1125 = vmatprep.subr.mxu0 0.0
    %1126 = vmatpush1.msra.mxu0 0.0
    %1127 = vmatprep.subr.mxu0 0.0
    %1128 = vmatpush1.msra.mxu0 0.0
    %1129 = vmatprep.subr.mxu0 0.0
    %1130 = vmatpush1.msra.mxu0 0.0
    %1131 = vmatprep.subr.mxu0 0.0
    %1132 = vmatpush1.msra.mxu0 0.0
    %1133 = vmatprep.subr.mxu0 0.0
    %1134 = vmatpush1.msra.mxu0 0.0
    %1135 = vmatprep.subr.mxu0 0.0
    %1136 = vmatpush1.msra.mxu0 0.0
    %1137 = vmatprep.subr.mxu0 0.0
    %1138 = vmatpush1.msra.mxu0 0.0
    %1139 = vmatprep.subr.mxu0 0.0
    %1140 = vmatpush1.msra.mxu0 0.0
    %1141 = vmatprep.subr.mxu0 0.0
    %1142 = vmatpush1.msra.mxu0 0.0
    %1143 = vmatprep.subr.mxu0 0.0
    %1144 = vmatpush1.msra.mxu0 0.0
    %1145 = vmatprep.subr.mxu0 0.0
    %1146 = vmatpush1.msra.mxu0 0.0
    %1147 = vmatprep.subr.mxu0 0.0
    %1148 = vmatpush1.msra.mxu0 0.0
    %1149 = vmatprep.mubr.f32.mxu0 0.0
    %1150 = vmatmul.mubr.f32.gmra.mrb[0].mxu0 %v1061
    %v1151 = vpop.f32.mrb[0].mxu0
    %v1152 = vadd.f32 %v1083, %v1151
    %v1153 = vpop.f32.mrb[0].mxu0
    %1154 = vdwg.mxu0
    %v1155 = vtanh.pop %v1152
    %1156 = vst [vmem:[#allocation20] sm:$0xff] %v1155
    // Predicated region
    $region130: #{tpu_custom_call.1} parent=1 // pred_check
      _
    $region131: #{tpu_custom_call.1} parent=1 // pred_check_branch
      %1158 = sbr.rel (0) target = $region133
    $region132: #{tpu_custom_call.1} parent=1 // pred_region
      %s1160 = ssub.s32 128, 128
      %1161 = vsyncadd [#allocation4], %s1160
      %s1163 = sshll.u32 [#allocation20], 4
      %s1164 = int_to_ptr.vmem [resolvable:$true] %s1163
      %1166 = dma.vmem_to_hbm [thread:$0]  %s1164, 128, %s21, [#allocation4]
    $region133: #{tpu_custom_call.1} parent=1 // pred_fallthru
      _
    // Predicated region
    $region134: #{tpu_custom_call.1} parent=1 // pred_check
      _
    $region135: #{tpu_custom_call.1} parent=1 // pred_check_branch
      %1168 = sbr.rel (0) target = $region137
    $region136: #{tpu_custom_call.1} parent=1 // pred_region
      %1169 = dma.done [#allocation4], 128
    $region137: #{tpu_custom_call.1} parent=1 // pred_fallthru
      _
    %1170 = vsyncpa [#allocation3], 1
    %1171 = vsyncpa [#allocation6], 1
    %1172 = vsyncpa [#allocation9], 1
    %1173 = vsyncpa [#allocation12], 1
    %1174 = vsyncpa [#allocation15], 1
    %1175 = vsyncpa [#allocation18], 1
    %1176 = vsyncpa [#allocation4], 1

</llo_original>
